<compile_context>
chip_gen: v7x
topology: tpu7x:2x2x1
jax: 0.10.0
libtpu: 0.0.40
codegen_flags: <defaults>
</compile_context>

<pallas_src>
import jax
import jax.numpy as jnp
import numpy as np
from jax.experimental import pallas as pl
from jax.experimental.pallas import tpu as pltpu

_SQRT1_2 = 0.7071067811865476


# ----------------------------------------------------------------------------
# small math helpers (constant-matrix construction = plain-JAX glue)
# ----------------------------------------------------------------------------
def _dct_mat(n):
    # torch_dct (norm=None) DCT-II matrix: D[k, m] = 2 * cos(pi*(2m+1)*k/(2n))
    i = jnp.arange(n, dtype=jnp.float32)
    return 2.0 * jnp.cos(jnp.pi * (2.0 * i[None, :] + 1.0) * i[:, None] / (2.0 * n))


def _idct_mat(n):
    # Exact inverse of the matrix above (DCT-III with the matching scaling).
    i = jnp.arange(n, dtype=jnp.float32)
    m = jnp.cos(jnp.pi * (2.0 * i[:, None] + 1.0) * i[None, :] / (2.0 * n)) / n
    w = jnp.ones((n,), jnp.float32).at[0].set(0.5)
    return m * w[None, :]


def _gelu_erf(x):
    # Exact (erf-based) GELU, matching torch.nn.functional.gelu default.
    # A&S 7.1.26 polynomial; the divide goes to the (otherwise idle) EUP slot.
    a1, a2, a3, a4, a5 = (0.254829592, -0.284496736, 1.421413741,
                          -1.453152027, 1.061405429)
    p = 0.3275911
    z = jnp.abs(x) * _SQRT1_2
    t = pl.reciprocal(1.0 + p * z, approx=True)
    poly = ((((a5 * t + a4) * t + a3) * t + a2) * t + a1) * t
    erf_abs = 1.0 - poly * jnp.exp(-z * z)
    erf = jnp.where(x < 0.0, -erf_abs, erf_abs)
    return 0.5 * x * (1.0 + erf)


# ----------------------------------------------------------------------------
# Wrapper: parameter re-packing (glue) + pallas_call.
# ----------------------------------------------------------------------------
def fgdfn_forward(x_nchw, params, *, b_blk=None):
    """FGDFN forward. x_nchw: (N, C, H, W) f32; params: PyTorch-shaped weights."""
    N, C, H, W = x_nchw.shape
    HW = H * W                      # 256 here -> 2 full lane tiles
    C2 = 2 * C
    f32 = jnp.float32
    bf16 = jnp.bfloat16

    # Batch block per grid step: largest of (4, 2) that divides N while keeping
    # the grid length >= 2 (both v7x TensorCores busy); else 1 image per step.
    if b_blk is None:
        b_blk = 1
        for cand in (4, 2):
            if N % cand == 0 and N // cand >= 2:
                b_blk = cand
                break
    assert N % b_blk == 0
    grid_n = N // b_blk

    # --- re-pack PyTorch-shaped parameters for the (C, HW) kernel layout ---
    # 1x1 convs: out = W @ x (channels on sublanes), so no weight transpose.
    w_in_m = params["w_in"][:, :, 0, 0].astype(bf16)           # (2C, C)
    w_out_m = params["w_out"][:, :, 0, 0].astype(bf16)         # (C, C)
    b_in = params["b_in"].astype(f32)                          # (2C,)
    b_dw = params["b_dw"].astype(f32)                          # (2C,)
    b_out = params["b_out"].astype(f32)                        # (C,)

    # Depthwise taps combined with boundary-validity masks:
    #   tapmask[t, c, hw] = w_dw[c, t] * valid(t, hw),  t = ky*3 + kx,
    #   dy = ky - 1, dx = kx - 1, valid iff (h+dy, w+dx) inside the image.
    taps = params["w_dw"][:, 0].reshape(C2, 9).astype(f32)     # (2C, 9)
    hh = np.arange(HW) // W
    ww = np.arange(HW) % W
    valid_np = np.zeros((9, HW), np.float32)
    for t in range(9):
        dy, dx = t // 3 - 1, t % 3 - 1
        valid_np[t] = ((hh + dy >= 0) & (hh + dy < H) &
                       (ww + dx >= 0) & (ww + dx < W)).astype(np.float32)
    valid = jnp.asarray(valid_np)                              # (9, HW)
    tapmask = taps.T[:, :, None] * valid[:, None, :]           # (9, 2C, HW)

    # Fold the project_in bias through the (linear) depthwise conv together
    # with the depthwise bias:  dw(Wx + b_in) + b_dw = dw(Wx) + b_fold.
    b_fold = b_dw[:, None] + b_in[:, None] * jnp.sum(tapmask, axis=0)  # (2C, HW)
    b_out_b = jnp.broadcast_to(b_out[:, None], (C, HW)).astype(f32)    # (C, HW)

    # Kronecker 2-D DCT / IDCT (torch_dct norm=None), pre-transposed so the
    # kernel does   xd = x1 @ K^T   with channels on rows.  bf16 MXU operands.
    k_dct_t = jnp.kron(_dct_mat(H), _dct_mat(W)).T.astype(bf16)        # (HW, HW)
    k_idct_t = jnp.kron(_idct_mat(H), _idct_mat(W)).T.astype(bf16)     # (HW, HW)

    # SE bottleneck weights, zero-padded on the Cr axis to 8 (tile-friendly,
    # mathematically identical: extra rows/cols contribute exactly zero).
    Cr = params["se_w1"].shape[0]
    Crp = max(8, ((Cr + 7) // 8) * 8)
    se_w1_p = jnp.zeros((Crp, C), f32).at[:Cr, :].set(params["se_w1"].astype(f32))
    se_w2_p = jnp.zeros((C, Crp), f32).at[:, :Cr].set(params["se_w2"].astype(f32))

    # NCHW -> (N, C, H*W): pure reshape, channels on sublanes, spatial on lanes.
    x_flat = x_nchw.reshape(N, C, HW).astype(f32)

    # Circular-roll shifts for the 8 off-center taps (np.roll semantics:
    # out[i] = in[i - shift]); boundary wrap-around is zeroed by tapmask.
    shifts = {t: (-((t // 3 - 1) * W + (t % 3 - 1))) % HW
              for t in (0, 1, 2, 3, 5, 6, 7, 8)}

    # ------------------------------------------------------------------
    # Pallas kernel: b_blk images per grid step (statically unrolled).
    # ------------------------------------------------------------------
    def kernel(x_ref, w_in_ref, tm_ref, b_fold_ref, kdct_ref, kidct_ref,
               se_w1_ref, se_w2_ref, w_out_ref, b_out_ref, o_ref):
        for b in range(b_blk):
            xb = x_ref[b].astype(bf16)                           # (C, HW)

            # project_in (1x1 conv): (2C, C) @ (C, HW), bf16 MXU, f32 acc.
            h = jnp.dot(w_in_ref[...], xb,
                        preferred_element_type=f32)              # (2C, HW)

            # Depthwise 3x3 conv (padding=1): center tap + 8 static lane-axis
            # rolls (XLU), each multiply-accumulated against the precombined
            # per-channel-tap * boundary-mask constant (pure VPU).
            acc = h * tm_ref[4]
            for t in (0, 1, 2, 3, 5, 6, 7, 8):
                acc = acc + pltpu.roll(h, shifts[t], 1) * tm_ref[t]
            x_dw = acc + b_fold_ref[...]                         # (2C, HW)

            x1 = x_dw[:C, :]           # aligned sublane split (C = mult. of 8)
            x2 = x_dw[C:, :]

            # dct_2d (torch_dct, norm=None): lane-dense Kronecker matmul.
            xd = jnp.dot(x1.astype(bf16), kdct_ref[...],
                         preferred_element_type=f32)             # (C, HW)

            # SELayer: avg-pool over lanes -> fc -> relu -> fc -> sigmoid.
            # Tiny 1-column matmuls, kept f32 (precision of the global scale).
            y = jnp.sum(xd, axis=1, keepdims=True) * (1.0 / HW)  # (C, 1)
            z = jnp.maximum(jnp.dot(se_w1_ref[...], y,
                                    preferred_element_type=f32), 0.0)
            s_se = jax.nn.sigmoid(jnp.dot(se_w2_ref[...], z,
                                          preferred_element_type=f32))
            xd = xd * s_se                                       # lane broadcast

            # idct_2d
            x1i = jnp.dot(xd.astype(bf16), kidct_ref[...],
                          preferred_element_type=f32)            # (C, HW)

            # gelu(x1) * x2 (exact erf GELU), then project_out (1x1 conv).
            g = _gelu_erf(x1i) * x2
            out = (jnp.dot(w_out_ref[...], g.astype(bf16),
                           preferred_element_type=f32) + b_out_ref[...])
            o_ref[b] = out.astype(o_ref.dtype)                   # 256-lane vst

    c2 = lambda n: (0, 0)
    c3 = lambda n: (0, 0, 0)

    out_flat = pl.pallas_call(
        kernel,
        out_shape=jax.ShapeDtypeStruct((N, C, HW), f32),
        grid=(grid_n,),
        in_specs=[
            pl.BlockSpec((b_blk, C, HW), lambda n: (n, 0, 0)),   # x (b_blk images)
            pl.BlockSpec((C2, C), c2),                           # w_in (bf16)
            pl.BlockSpec((9, C2, HW), c3),                       # tap*mask consts
            pl.BlockSpec((C2, HW), c2),                          # folded biases
            pl.BlockSpec((HW, HW), c2),                          # k_dct^T (bf16)
            pl.BlockSpec((HW, HW), c2),                          # k_idct^T (bf16)
            pl.BlockSpec((Crp, C), c2),                          # se_w1 (padded)
            pl.BlockSpec((C, Crp), c2),                          # se_w2 (padded)
            pl.BlockSpec((C, C), c2),                            # w_out (bf16)
            pl.BlockSpec((C, HW), c2),                           # b_out (broadcast)
        ],
        out_specs=pl.BlockSpec((b_blk, C, HW), lambda n: (n, 0, 0)),
        compiler_params=pltpu.CompilerParams(
            dimension_semantics=("parallel",)),
    )(x_flat, w_in_m, tapmask, b_fold, k_dct_t, k_idct_t,
      se_w1_p, se_w2_p, w_out_m, b_out_b)

    return out_flat.reshape(N, C, H, W)                          # already NCHW


# ----------------------------------------------------------------------------
# Pure-JAX reference (independent formulation, f32 "highest" precision ground
# truth) for correctness checking.
# ----------------------------------------------------------------------------
def reference_forward(x, params):
    hp = jax.lax.Precision.HIGHEST
    N, C, H, W = x.shape
    h = (jnp.einsum("nchw,oc->nohw", x, params["w_in"][:, :, 0, 0], precision=hp)
         + params["b_in"][None, :, None, None])
    hpad = jnp.pad(h, ((0, 0), (0, 0), (1, 1), (1, 1)))
    dw = jnp.zeros_like(h)
    for ky in range(3):
        for kx in range(3):
            tap = params["w_dw"][:, 0, ky, kx][None, :, None, None]
            dw = dw + hpad[:, :, ky:ky + H, kx:kx + W] * tap
    dw = dw + params["b_dw"][None, :, None, None]
    x1, x2 = dw[:, :C], dw[:, C:]
    xd = jnp.einsum("uh,nchw,vw->ncuv", _dct_mat(H), x1, _dct_mat(W), precision=hp)
    y = jnp.mean(xd, axis=(2, 3))
    z = jax.nn.relu(jnp.einsum("nc,rc->nr", y, params["se_w1"], precision=hp))
    s = jax.nn.sigmoid(jnp.einsum("nr,cr->nc", z, params["se_w2"], precision=hp))
    xd = xd * s[:, :, None, None]
    x1i = jnp.einsum("uh,nchw,vw->ncuv", _idct_mat(H), xd, _idct_mat(W), precision=hp)
    g = jax.nn.gelu(x1i, approximate=False) * x2
    return (jnp.einsum("nchw,oc->nohw", g, params["w_out"][:, :, 0, 0], precision=hp)
            + params["b_out"][None, :, None, None])


# ----------------------------------------------------------------------------
if __name__ == "__main__":
    # dim=32 so that the standard SELayer reduction (16) gives hidden width 2.
    N, C, H, W = 2, 32, 16, 16
    key = jax.random.PRNGKey(0)
    ks = jax.random.split(key, 9)
    params = {
        # PyTorch module shapes: Conv2d(dim, 2*dim, 1), dw Conv2d(2*dim, 2*dim,
        # 3, groups=2*dim), Conv2d(dim, dim, 1), SE Linear weights (bias=False).
        "w_in":  0.2 * jax.random.normal(ks[0], (2 * C, C, 1, 1), jnp.float32),
        "b_in":  0.1 * jax.random.normal(ks[1], (2 * C,), jnp.float32),
        "w_dw":  0.2 * jax.random.normal(ks[2], (2 * C, 1, 3, 3), jnp.float32),
        "b_dw":  0.1 * jax.random.normal(ks[3], (2 * C,), jnp.float32),
        "w_out": 0.2 * jax.random.normal(ks[4], (C, C, 1, 1), jnp.float32),
        "b_out": 0.1 * jax.random.normal(ks[5], (C,), jnp.float32),
        "se_w1": 0.2 * jax.random.normal(ks[6], (C // 16, C), jnp.float32),
        "se_w2": 0.2 * jax.random.normal(ks[7], (C, C // 16), jnp.float32),
    }
    x = jax.random.normal(ks[8], (N, C, H, W), jnp.float32)

    out = jax.block_until_ready(fgdfn_forward(x, params))
    ref = jax.block_until_ready(reference_forward(x, params))
    # Kernel runs project_in / DCT / IDCT / project_out as single-pass bf16
    # MXU ops (f32 accumulation); the reference is an f32 "highest"-precision
    # ground truth, so allow bf16-chain-level tolerance through that path.
    np.testing.assert_allclose(np.asarray(out), np.asarray(ref),
                               rtol=3e-2, atol=3e-2)
    print("KERNEL_OK")
</pallas_src>

<mosaic_0001>
module attributes {stable_mosaic.version = 11 : i64} {
  func.func @kernel(%arg0: i32, %arg1: memref<1x32x256xf32, #tpu.memory_space<vmem>>, %arg2: memref<64x32xbf16, #tpu.memory_space<vmem>>, %arg3: memref<9x64x256xf32, #tpu.memory_space<vmem>>, %arg4: memref<64x256xf32, #tpu.memory_space<vmem>>, %arg5: memref<256x256xbf16, #tpu.memory_space<vmem>>, %arg6: memref<256x256xbf16, #tpu.memory_space<vmem>>, %arg7: memref<8x32xf32, #tpu.memory_space<vmem>>, %arg8: memref<32x8xf32, #tpu.memory_space<vmem>>, %arg9: memref<32x32xbf16, #tpu.memory_space<vmem>>, %arg10: memref<32x256xf32, #tpu.memory_space<vmem>>, %arg11: memref<1x32x256xf32, #tpu.memory_space<vmem>>) attributes {dimension_semantics = [#tpu.dimension_semantics<parallel>], iteration_bounds = array<i64: 2>, scalar_prefetch = 0 : i64, scratch_operands = 0 : i64, tpu.core_type = #tpu.core_type<tc>, window_params = [{transform_indices = @transform_0, window_bounds = array<i64: 1, 32, 256>}, {pipeline_mode = #tpu.pipeline_mode<synchronous>, transform_indices = @transform_1, window_bounds = array<i64: 64, 32>}, {pipeline_mode = #tpu.pipeline_mode<synchronous>, transform_indices = @transform_2, window_bounds = array<i64: 9, 64, 256>}, {pipeline_mode = #tpu.pipeline_mode<synchronous>, transform_indices = @transform_3, window_bounds = array<i64: 64, 256>}, {pipeline_mode = #tpu.pipeline_mode<synchronous>, transform_indices = @transform_4, window_bounds = array<i64: 256, 256>}, {pipeline_mode = #tpu.pipeline_mode<synchronous>, transform_indices = @transform_5, window_bounds = array<i64: 256, 256>}, {pipeline_mode = #tpu.pipeline_mode<synchronous>, transform_indices = @transform_6, window_bounds = array<i64: 8, 32>}, {pipeline_mode = #tpu.pipeline_mode<synchronous>, transform_indices = @transform_7, window_bounds = array<i64: 32, 8>}, {pipeline_mode = #tpu.pipeline_mode<synchronous>, transform_indices = @transform_8, window_bounds = array<i64: 32, 32>}, {pipeline_mode = #tpu.pipeline_mode<synchronous>, transform_indices = @transform_9, window_bounds = array<i64: 32, 256>}, {transform_indices = @transform_10, window_bounds = array<i64: 1, 32, 256>}]} {
    %c0 = arith.constant 0 : index
    %c0_0 = arith.constant 0 : index
    %c0_1 = arith.constant 0 : index
    %0 = vector.load %arg1[%c0, %c0_0, %c0_1] : memref<1x32x256xf32, #tpu.memory_space<vmem>>, vector<1x32x256xf32>
    %1 = vector.shape_cast %0 : vector<1x32x256xf32> to vector<32x256xf32>
    %2 = arith.truncf %1 : vector<32x256xf32> to vector<32x256xbf16>
    %c0_2 = arith.constant 0 : index
    %c0_3 = arith.constant 0 : index
    %3 = vector.load %arg2[%c0_2, %c0_3] : memref<64x32xbf16, #tpu.memory_space<vmem>>, vector<64x32xbf16>
    %cst = arith.constant dense<0.000000e+00> : vector<64x256xf32>
    %4 = tpu.matmul %3, %2, %cst {dimension_numbers = #tpu.dot_dimension_numbers<[1], [0], [0], [1], [0, 0, 1, 1], [], []>} : vector<64x32xbf16>, vector<32x256xbf16>, vector<64x256xf32> -> vector<64x256xf32>
    %c4 = arith.constant 4 : index
    %c0_4 = arith.constant 0 : index
    %c0_5 = arith.constant 0 : index
    %5 = vector.load %arg3[%c4, %c0_4, %c0_5] : memref<9x64x256xf32, #tpu.memory_space<vmem>>, vector<1x64x256xf32>
    %6 = vector.shape_cast %5 : vector<1x64x256xf32> to vector<64x256xf32>
    %7 = arith.mulf %4, %6 : vector<64x256xf32>
    %c17_i32 = arith.constant 17 : i32
    %8 = tpu.dynamic_rotate %4 by %c17_i32 dim 1 : vector<64x256xf32>, i32 -> vector<64x256xf32>
    %c0_6 = arith.constant 0 : index
    %c0_7 = arith.constant 0 : index
    %c0_8 = arith.constant 0 : index
    %9 = vector.load %arg3[%c0_6, %c0_7, %c0_8] : memref<9x64x256xf32, #tpu.memory_space<vmem>>, vector<1x64x256xf32>
    %10 = vector.shape_cast %9 : vector<1x64x256xf32> to vector<64x256xf32>
    %11 = arith.mulf %8, %10 : vector<64x256xf32>
    %12 = arith.addf %7, %11 : vector<64x256xf32>
    %c16_i32 = arith.constant 16 : i32
    %13 = tpu.dynamic_rotate %4 by %c16_i32 dim 1 : vector<64x256xf32>, i32 -> vector<64x256xf32>
    %c1 = arith.constant 1 : index
    %c0_9 = arith.constant 0 : index
    %c0_10 = arith.constant 0 : index
    %14 = vector.load %arg3[%c1, %c0_9, %c0_10] : memref<9x64x256xf32, #tpu.memory_space<vmem>>, vector<1x64x256xf32>
    %15 = vector.shape_cast %14 : vector<1x64x256xf32> to vector<64x256xf32>
    %16 = arith.mulf %13, %15 : vector<64x256xf32>
    %17 = arith.addf %12, %16 : vector<64x256xf32>
    %c15_i32 = arith.constant 15 : i32
    %18 = tpu.dynamic_rotate %4 by %c15_i32 dim 1 : vector<64x256xf32>, i32 -> vector<64x256xf32>
    %c2 = arith.constant 2 : index
    %c0_11 = arith.constant 0 : index
    %c0_12 = arith.constant 0 : index
    %19 = vector.load %arg3[%c2, %c0_11, %c0_12] : memref<9x64x256xf32, #tpu.memory_space<vmem>>, vector<1x64x256xf32>
    %20 = vector.shape_cast %19 : vector<1x64x256xf32> to vector<64x256xf32>
    %21 = arith.mulf %18, %20 : vector<64x256xf32>
    %22 = arith.addf %17, %21 : vector<64x256xf32>
    %c1_i32 = arith.constant 1 : i32
    %23 = tpu.dynamic_rotate %4 by %c1_i32 dim 1 : vector<64x256xf32>, i32 -> vector<64x256xf32>
    %c3 = arith.constant 3 : index
    %c0_13 = arith.constant 0 : index
    %c0_14 = arith.constant 0 : index
    %24 = vector.load %arg3[%c3, %c0_13, %c0_14] : memref<9x64x256xf32, #tpu.memory_space<vmem>>, vector<1x64x256xf32>
    %25 = vector.shape_cast %24 : vector<1x64x256xf32> to vector<64x256xf32>
    %26 = arith.mulf %23, %25 : vector<64x256xf32>
    %27 = arith.addf %22, %26 : vector<64x256xf32>
    %c255_i32 = arith.constant 255 : i32
    %28 = tpu.dynamic_rotate %4 by %c255_i32 dim 1 : vector<64x256xf32>, i32 -> vector<64x256xf32>
    %c5 = arith.constant 5 : index
    %c0_15 = arith.constant 0 : index
    %c0_16 = arith.constant 0 : index
    %29 = vector.load %arg3[%c5, %c0_15, %c0_16] : memref<9x64x256xf32, #tpu.memory_space<vmem>>, vector<1x64x256xf32>
    %30 = vector.shape_cast %29 : vector<1x64x256xf32> to vector<64x256xf32>
    %31 = arith.mulf %28, %30 : vector<64x256xf32>
    %32 = arith.addf %27, %31 : vector<64x256xf32>
    %c241_i32 = arith.constant 241 : i32
    %33 = tpu.dynamic_rotate %4 by %c241_i32 dim 1 : vector<64x256xf32>, i32 -> vector<64x256xf32>
    %c6 = arith.constant 6 : index
    %c0_17 = arith.constant 0 : index
    %c0_18 = arith.constant 0 : index
    %34 = vector.load %arg3[%c6, %c0_17, %c0_18] : memref<9x64x256xf32, #tpu.memory_space<vmem>>, vector<1x64x256xf32>
    %35 = vector.shape_cast %34 : vector<1x64x256xf32> to vector<64x256xf32>
    %36 = arith.mulf %33, %35 : vector<64x256xf32>
    %37 = arith.addf %32, %36 : vector<64x256xf32>
    %c240_i32 = arith.constant 240 : i32
    %38 = tpu.dynamic_rotate %4 by %c240_i32 dim 1 : vector<64x256xf32>, i32 -> vector<64x256xf32>
    %c7 = arith.constant 7 : index
    %c0_19 = arith.constant 0 : index
    %c0_20 = arith.constant 0 : index
    %39 = vector.load %arg3[%c7, %c0_19, %c0_20] : memref<9x64x256xf32, #tpu.memory_space<vmem>>, vector<1x64x256xf32>
    %40 = vector.shape_cast %39 : vector<1x64x256xf32> to vector<64x256xf32>
    %41 = arith.mulf %38, %40 : vector<64x256xf32>
    %42 = arith.addf %37, %41 : vector<64x256xf32>
    %c239_i32 = arith.constant 239 : i32
    %43 = tpu.dynamic_rotate %4 by %c239_i32 dim 1 : vector<64x256xf32>, i32 -> vector<64x256xf32>
    %c8 = arith.constant 8 : index
    %c0_21 = arith.constant 0 : index
    %c0_22 = arith.constant 0 : index
    %44 = vector.load %arg3[%c8, %c0_21, %c0_22] : memref<9x64x256xf32, #tpu.memory_space<vmem>>, vector<1x64x256xf32>
    %45 = vector.shape_cast %44 : vector<1x64x256xf32> to vector<64x256xf32>
    %46 = arith.mulf %43, %45 : vector<64x256xf32>
    %47 = arith.addf %42, %46 : vector<64x256xf32>
    %c0_23 = arith.constant 0 : index
    %c0_24 = arith.constant 0 : index
    %48 = vector.load %arg4[%c0_23, %c0_24] : memref<64x256xf32, #tpu.memory_space<vmem>>, vector<64x256xf32>
    %49 = arith.addf %47, %48 : vector<64x256xf32>
    %50 = vector.extract_strided_slice %49 {offsets = [0, 0], sizes = [32, 256], strides = [1, 1]} : vector<64x256xf32> to vector<32x256xf32>
    %51 = vector.extract_strided_slice %49 {offsets = [32, 0], sizes = [32, 256], strides = [1, 1]} : vector<64x256xf32> to vector<32x256xf32>
    %52 = arith.truncf %50 : vector<32x256xf32> to vector<32x256xbf16>
    %c0_25 = arith.constant 0 : index
    %c0_26 = arith.constant 0 : index
    %53 = vector.load %arg5[%c0_25, %c0_26] : memref<256x256xbf16, #tpu.memory_space<vmem>>, vector<256x256xbf16>
    %cst_27 = arith.constant dense<0.000000e+00> : vector<32x256xf32>
    %54 = tpu.matmul %52, %53, %cst_27 {dimension_numbers = #tpu.dot_dimension_numbers<[1], [0], [0], [1], [0, 0, 1, 1], [], []>} : vector<32x256xbf16>, vector<256x256xbf16>, vector<32x256xf32> -> vector<32x256xf32>
    %cst_28 = arith.constant dense<0.000000e+00> : vector<32xf32>
    %55 = vector.multi_reduction <add>, %54, %cst_28 [1] : vector<32x256xf32> to vector<32xf32>
    %56 = vector.shape_cast %55 : vector<32xf32> to vector<32x1xf32>
    %cst_29 = arith.constant 3.906250e-03 : f32
    %57 = vector.broadcast %cst_29 : f32 to vector<32x1xf32>
    %58 = arith.mulf %56, %57 : vector<32x1xf32>
    %c0_30 = arith.constant 0 : index
    %c0_31 = arith.constant 0 : index
    %59 = vector.load %arg7[%c0_30, %c0_31] : memref<8x32xf32, #tpu.memory_space<vmem>>, vector<8x32xf32>
    %cst_32 = arith.constant dense<0.000000e+00> : vector<8x1xf32>
    %60 = tpu.matmul %59, %58, %cst_32 {dimension_numbers = #tpu.dot_dimension_numbers<[1], [0], [0], [1], [0, 0, 1, 1], [], []>} : vector<8x32xf32>, vector<32x1xf32>, vector<8x1xf32> -> vector<8x1xf32>
    %cst_33 = arith.constant 0.000000e+00 : f32
    %61 = vector.broadcast %cst_33 : f32 to vector<8x1xf32>
    %62 = arith.maximumf %60, %61 : vector<8x1xf32>
    %c0_34 = arith.constant 0 : index
    %c0_35 = arith.constant 0 : index
    %63 = vector.load %arg8[%c0_34, %c0_35] : memref<32x8xf32, #tpu.memory_space<vmem>>, vector<32x8xf32>
    %cst_36 = arith.constant dense<0.000000e+00> : vector<32x1xf32>
    %64 = tpu.matmul %63, %62, %cst_36 {dimension_numbers = #tpu.dot_dimension_numbers<[1], [0], [0], [1], [0, 0, 1, 1], [], []>} : vector<32x8xf32>, vector<8x1xf32>, vector<32x1xf32> -> vector<32x1xf32>
    %65 = arith.negf %64 : vector<32x1xf32>
    %66 = math.exp %65 : vector<32x1xf32>
    %cst_37 = arith.constant 1.000000e+00 : f32
    %67 = vector.broadcast %cst_37 : f32 to vector<32x1xf32>
    %68 = arith.addf %67, %66 : vector<32x1xf32>
    %69 = arith.divf %67, %68 : vector<32x1xf32>
    %70 = vector.broadcast %69 : vector<32x1xf32> to vector<32x256xf32>
    %71 = arith.mulf %54, %70 : vector<32x256xf32>
    %72 = arith.truncf %71 : vector<32x256xf32> to vector<32x256xbf16>
    %c0_38 = arith.constant 0 : index
    %c0_39 = arith.constant 0 : index
    %73 = vector.load %arg6[%c0_38, %c0_39] : memref<256x256xbf16, #tpu.memory_space<vmem>>, vector<256x256xbf16>
    %cst_40 = arith.constant dense<0.000000e+00> : vector<32x256xf32>
    %74 = tpu.matmul %72, %73, %cst_40 {dimension_numbers = #tpu.dot_dimension_numbers<[1], [0], [0], [1], [0, 0, 1, 1], [], []>} : vector<32x256xbf16>, vector<256x256xbf16>, vector<32x256xf32> -> vector<32x256xf32>
    %75 = math.absf %74 : vector<32x256xf32>
    %cst_41 = arith.constant 0.707106769 : f32
    %76 = vector.broadcast %cst_41 : f32 to vector<32x256xf32>
    %77 = arith.mulf %75, %76 : vector<32x256xf32>
    %cst_42 = arith.constant 0.327591091 : f32
    %78 = vector.broadcast %cst_42 : f32 to vector<32x256xf32>
    %79 = arith.mulf %78, %77 : vector<32x256xf32>
    %cst_43 = arith.constant 1.000000e+00 : f32
    %80 = vector.broadcast %cst_43 : f32 to vector<32x256xf32>
    %81 = arith.addf %80, %79 : vector<32x256xf32>
    %82 = tpu.reciprocal %81 {approx = true} : vector<32x256xf32> -> vector<32x256xf32>
    %cst_44 = arith.constant 1.06140542 : f32
    %83 = vector.broadcast %cst_44 : f32 to vector<32x256xf32>
    %84 = arith.mulf %83, %82 : vector<32x256xf32>
    %cst_45 = arith.constant -1.45315206 : f32
    %85 = vector.broadcast %cst_45 : f32 to vector<32x256xf32>
    %86 = arith.addf %84, %85 : vector<32x256xf32>
    %87 = arith.mulf %86, %82 : vector<32x256xf32>
    %cst_46 = arith.constant 1.42141378 : f32
    %88 = vector.broadcast %cst_46 : f32 to vector<32x256xf32>
    %89 = arith.addf %87, %88 : vector<32x256xf32>
    %90 = arith.mulf %89, %82 : vector<32x256xf32>
    %cst_47 = arith.constant -0.284496725 : f32
    %91 = vector.broadcast %cst_47 : f32 to vector<32x256xf32>
    %92 = arith.addf %90, %91 : vector<32x256xf32>
    %93 = arith.mulf %92, %82 : vector<32x256xf32>
    %cst_48 = arith.constant 0.254829586 : f32
    %94 = vector.broadcast %cst_48 : f32 to vector<32x256xf32>
    %95 = arith.addf %93, %94 : vector<32x256xf32>
    %96 = arith.mulf %95, %82 : vector<32x256xf32>
    %cst_49 = arith.constant 0.000000e+00 : f32
    %97 = vector.broadcast %cst_49 : f32 to vector<32x256xf32>
    %98 = arith.subf %97, %77 : vector<32x256xf32>
    %99 = arith.mulf %98, %77 : vector<32x256xf32>
    %100 = math.exp %99 : vector<32x256xf32>
    %101 = arith.mulf %96, %100 : vector<32x256xf32>
    %cst_50 = arith.constant 1.000000e+00 : f32
    %102 = vector.broadcast %cst_50 : f32 to vector<32x256xf32>
    %103 = arith.subf %102, %101 : vector<32x256xf32>
    %cst_51 = arith.constant 0.000000e+00 : f32
    %104 = vector.broadcast %cst_51 : f32 to vector<32x256xf32>
    %105 = arith.cmpf olt, %74, %104 : vector<32x256xf32>
    %cst_52 = arith.constant 0.000000e+00 : f32
    %106 = vector.broadcast %cst_52 : f32 to vector<32x256xf32>
    %107 = arith.subf %106, %103 : vector<32x256xf32>
    %108 = arith.select %105, %107, %103 : vector<32x256xi1>, vector<32x256xf32>
    %cst_53 = arith.constant 5.000000e-01 : f32
    %109 = vector.broadcast %cst_53 : f32 to vector<32x256xf32>
    %110 = arith.mulf %109, %74 : vector<32x256xf32>
    %cst_54 = arith.constant 1.000000e+00 : f32
    %111 = vector.broadcast %cst_54 : f32 to vector<32x256xf32>
    %112 = arith.addf %111, %108 : vector<32x256xf32>
    %113 = arith.mulf %110, %112 : vector<32x256xf32>
    %114 = arith.mulf %113, %51 : vector<32x256xf32>
    %c0_55 = arith.constant 0 : index
    %c0_56 = arith.constant 0 : index
    %115 = vector.load %arg9[%c0_55, %c0_56] : memref<32x32xbf16, #tpu.memory_space<vmem>>, vector<32x32xbf16>
    %116 = arith.truncf %114 : vector<32x256xf32> to vector<32x256xbf16>
    %cst_57 = arith.constant dense<0.000000e+00> : vector<32x256xf32>
    %117 = tpu.matmul %115, %116, %cst_57 {dimension_numbers = #tpu.dot_dimension_numbers<[1], [0], [0], [1], [0, 0, 1, 1], [], []>} : vector<32x32xbf16>, vector<32x256xbf16>, vector<32x256xf32> -> vector<32x256xf32>
    %c0_58 = arith.constant 0 : index
    %c0_59 = arith.constant 0 : index
    %118 = vector.load %arg10[%c0_58, %c0_59] : memref<32x256xf32, #tpu.memory_space<vmem>>, vector<32x256xf32>
    %119 = arith.addf %117, %118 : vector<32x256xf32>
    %c0_60 = arith.constant 0 : index
    %c0_61 = arith.constant 0 : index
    %c0_62 = arith.constant 0 : index
    %120 = vector.load %arg11[%c0_60, %c0_61, %c0_62] : memref<1x32x256xf32, #tpu.memory_space<vmem>>, vector<1x32x256xf32>
    %121 = vector.shape_cast %120 : vector<1x32x256xf32> to vector<32x256xf32>
    %122 = vector.shape_cast %119 : vector<32x256xf32> to vector<1x32x256xf32>
    tpu.vector_store %arg11[%c0_60, %c0_61, %c0_62], %122 {strides = array<i32>} : memref<1x32x256xf32, #tpu.memory_space<vmem>>, vector<1x32x256xf32>,
    return
  }
  func.func @transform_0(%arg0: i32) -> (i32, i32, i32) {
    %c0_i32 = arith.constant 0 : i32
    %c0_i32_0 = arith.constant 0 : i32
    %c0_i32_1 = arith.constant 0 : i32
    return %arg0, %c0_i32, %c0_i32_0 : i32, i32, i32
  }
  func.func @transform_1(%arg0: i32) -> (i32, i32) {
    %c0_i32 = arith.constant 0 : i32
    %c0_i32_0 = arith.constant 0 : i32
    %c0_i32_1 = arith.constant 0 : i32
    return %c0_i32, %c0_i32_0 : i32, i32
  }
  func.func @transform_2(%arg0: i32) -> (i32, i32, i32) {
    %c0_i32 = arith.constant 0 : i32
    %c0_i32_0 = arith.constant 0 : i32
    %c0_i32_1 = arith.constant 0 : i32
    %c0_i32_2 = arith.constant 0 : i32
    return %c0_i32, %c0_i32_0, %c0_i32_1 : i32, i32, i32
  }
  func.func @transform_3(%arg0: i32) -> (i32, i32) {
    %c0_i32 = arith.constant 0 : i32
    %c0_i32_0 = arith.constant 0 : i32
    %c0_i32_1 = arith.constant 0 : i32
    return %c0_i32, %c0_i32_0 : i32, i32
  }
  func.func @transform_4(%arg0: i32) -> (i32, i32) {
    %c0_i32 = arith.constant 0 : i32
    %c0_i32_0 = arith.constant 0 : i32
    %c0_i32_1 = arith.constant 0 : i32
    return %c0_i32, %c0_i32_0 : i32, i32
  }
  func.func @transform_5(%arg0: i32) -> (i32, i32) {
    %c0_i32 = arith.constant 0 : i32
    %c0_i32_0 = arith.constant 0 : i32
    %c0_i32_1 = arith.constant 0 : i32
    return %c0_i32, %c0_i32_0 : i32, i32
  }
  func.func @transform_6(%arg0: i32) -> (i32, i32) {
    %c0_i32 = arith.constant 0 : i32
    %c0_i32_0 = arith.constant 0 : i32
    %c0_i32_1 = arith.constant 0 : i32
    return %c0_i32, %c0_i32_0 : i32, i32
  }
  func.func @transform_7(%arg0: i32) -> (i32, i32) {
    %c0_i32 = arith.constant 0 : i32
    %c0_i32_0 = arith.constant 0 : i32
    %c0_i32_1 = arith.constant 0 : i32
    return %c0_i32, %c0_i32_0 : i32, i32
  }
  func.func @transform_8(%arg0: i32) -> (i32, i32) {
    %c0_i32 = arith.constant 0 : i32
    %c0_i32_0 = arith.constant 0 : i32
    %c0_i32_1 = arith.constant 0 : i32
    return %c0_i32, %c0_i32_0 : i32, i32
  }
  func.func @transform_9(%arg0: i32) -> (i32, i32) {
    %c0_i32 = arith.constant 0 : i32
    %c0_i32_0 = arith.constant 0 : i32
    %c0_i32_1 = arith.constant 0 : i32
    return %c0_i32, %c0_i32_0 : i32, i32
  }
  func.func @transform_10(%arg0: i32) -> (i32, i32, i32) {
    %c0_i32 = arith.constant 0 : i32
    %c0_i32_0 = arith.constant 0 : i32
    %c0_i32_1 = arith.constant 0 : i32
    return %arg0, %c0_i32, %c0_i32_0 : i32, i32, i32
  }
}

</mosaic_0001>

<llo_original>
// kernel: tpu_custom_call.1
$region0: #{tpu_custom_call.1}
  #allocation0 [shape = 'u32[]', space=smem, size = 0x4, offset = 0x4, fixed_abs, tag = 'smem constant byte address 0x4 - core index']
  #allocation1 [shape = 'u32[144,128]{1,0:T(1,128)}', space=vmem, size = 0x12000, scoped, tag = 'internal scratch']
  %s0 = inlined_call_operand.hbm [shape: f32[2,32,256], index: 0, kind: input, shape index: {}]
  %s1 = inlined_call_operand.vmem [shape: bf16[64,32], index: 1, kind: input, shape index: {}]
  %s2 = inlined_call_operand.hbm [shape: f32[9,64,256], index: 2, kind: input, shape index: {}]
  %s3 = inlined_call_operand.hbm [shape: f32[64,256], index: 3, kind: input, shape index: {}]
  %s4 = inlined_call_operand.hbm [shape: bf16[256,256], index: 4, kind: input, shape index: {}]
  %s5 = inlined_call_operand.hbm [shape: bf16[256,256], index: 5, kind: input, shape index: {}]
  %s6 = inlined_call_operand.vmem [shape: f32[8,32], index: 6, kind: input, shape index: {}]
  %s7 = inlined_call_operand.vmem [shape: f32[32,8], index: 7, kind: input, shape index: {}]
  %s8 = inlined_call_operand.vmem [shape: bf16[32,32], index: 8, kind: input, shape index: {}]
  %s9 = inlined_call_operand.vmem [shape: f32[32,256], index: 9, kind: input, shape index: {}]
  %s10 = inlined_call_operand.hbm [shape: f32[2,32,256], index: 10, kind: output, shape index: {}]
  %s11 = sld [smem:[#allocation0]]
  $region93: #{tpu_custom_call.1} parent=0
    _
  %s13 = ssub.s32 1, %s11
  %s14 = scalar_select 0, %s13, %s11
  $region1: #{tpu_custom_call.1} parent=0
    #allocation2 [shape = 'u8[65536]{0}', space=vmem, size = 0x10000, scoped, tag = 'input window, operand 0']
    #allocation3 [shape = 's32[2]{0}', space=sflag, size = 0x8, scoped, tag = 'scoped memory for tpu_custom_call.1']
    #allocation4 [shape = 's32[2]{0}', space=sflag, size = 0x8, scoped, tag = 'scoped memory for tpu_custom_call.1']
    #allocation5 [shape = 'u8[589824]{0}', space=vmem, size = 0x90000, scoped, tag = 'input window, operand 2, single buffered']
    #allocation6 [shape = 's32[1]{0}', space=sflag, size = 0x4, scoped, tag = 'scoped memory for tpu_custom_call.1']
    #allocation7 [shape = 'u8[65536]{0}', space=vmem, size = 0x10000, scoped, tag = 'input window, operand 3, single buffered']
    #allocation8 [shape = 'u8[131072]{0}', space=vmem, size = 0x20000, scoped, tag = 'input window, operand 4, single buffered']
    #allocation9 [shape = 's32[1]{0}', space=sflag, size = 0x4, scoped, tag = 'scoped memory for tpu_custom_call.1']
    #allocation10 [shape = 'u8[131072]{0}', space=vmem, size = 0x20000, scoped, tag = 'input window, operand 5, single buffered']
    #allocation11 [shape = 'u8[65536]{0}', space=vmem, size = 0x10000, scoped, tag = 'output window, operand 0']
    %15 = vsyncpa [#allocation3], 0
    %s16 = scalar_lea.sflag [#allocation3], 1
    %17 = vsyncpa %s16, 0
    %18 = vsyncpa [#allocation6], 0
    %19 = vsyncpa [#allocation9], 0
    %20 = vsyncpa [#allocation4], 0
    %s21 = scalar_lea.sflag [#allocation4], 1
    %22 = vsyncpa %s21, 0
    loop: start=0, step=1, limit=4
    $region2: #{tpu_custom_call.1} parent=1 // loop_pre_header
      _
    $region3: #{tpu_custom_call.1} parent=1 // loop_header
      %s24 = sphi 0, %s28
      %p25 = scmp.ge.s32.totalorder %s24, 4
      %s34 = sphi 0, %s36
      %s37 = sphi 0, %s34
      %s38 = sphi 0, %s37
      %s54 = sphi 0, %s38
      %s58 = sphi 0, %s58
      %s60 = sphi 0, %s58
      %s61 = sphi 0, %s60
      %s75 = sphi 0, %s61
      %s79 = sphi 0, %s79
      %s81 = sphi 0, %s79
      %s82 = sphi 0, %s81
      %s96 = sphi 0, %s82
      %s100 = sphi 0, %s100
      %s102 = sphi 0, %s100
      %s103 = sphi 0, %s102
      %s117 = sphi 0, %s103
      %s121 = sphi 0, %s121
      %s123 = sphi 0, %s121
      %s124 = sphi 0, %s123
      %s138 = sphi 0, %s124
      %s142 = sphi 0, %s142
      %s144 = sphi 0, %s142
      %s145 = sphi 0, %s144
      %s159 = sphi 0, %s145
      %s163 = sphi 0, %s163
      %s165 = sphi 0, %s163
      %s166 = sphi 0, %s165
      %s180 = sphi 0, %s166
      %s184 = sphi 0, %s184
      %s186 = sphi 0, %s184
      %s187 = sphi 0, %s186
      %s201 = sphi 0, %s187
      %s205 = sphi 0, %s205
      %s207 = sphi 0, %s205
      %s208 = sphi 0, %s207
      %s222 = sphi 0, %s208
      %s226 = sphi 0, %s226
      %s228 = sphi 0, %s226
      %s229 = sphi 0, %s228
      %s243 = sphi 0, %s229
      %s249 = sphi 0, %s251
      %s252 = sphi 0, %s249
      %s253 = sphi 0, %s252
      %s269 = sphi 0, %s253
    $region4: #{tpu_custom_call.1} parent=1 // loop_header_branch
      %27 = sbr.rel (%p25) target = $region8
    $region5: #{tpu_custom_call.1} parent=1 // loop_body
      %s29 = ssub.s32 %s24, 1
      %s30 = ssub.s32 %s24, 2
      %s31 = sadd.s32 %s24, 1
      %s32 = ssub.s32 %s24, %s31
      %p33 = scmp.eq.s32.totalorder %s32, 0
      %s35 = sadd.s32 %s34, 1
      %s36 = scalar_select %p33, %s34, %s35
      %p39 = pneg %p33
      %p40 = scmp.eq.s32.totalorder %s24, 1
      %p41 = por %p39, %p40
      %p42 = scmp.ne.s32.totalorder %s34, %s37
      %p43 = scmp.eq.s32.totalorder %s24, 0
      %p44 = por %p42, %p43
      %p45 = scmp.ne.s32.totalorder %s34, %s37
      %p46 = scmp.eq.s32.totalorder %s29, 1
      %p47 = por %p45, %p46
      %p48 = scmp.ne.s32.totalorder %s37, %s38
      %p49 = scmp.eq.s32.totalorder %s29, 0
      %p50 = por %p48, %p49
      %p51 = scmp.ne.s32.totalorder %s37, %s38
      %p52 = scmp.eq.s32.totalorder %s30, 1
      %p53 = por %p51, %p52
      %p55 = scmp.ne.s32.totalorder %s38, %s54
      %p56 = scmp.eq.s32.totalorder %s30, 0
      %p57 = por %p55, %p56
      %s59 = sadd.s32 %s58, 1
      %p62 = scmp.eq.s32.totalorder %s24, 1
      %p63 = scmp.ne.s32.totalorder %s58, %s60
      %p64 = scmp.eq.s32.totalorder %s24, 0
      %p65 = por %p63, %p64
      %p66 = scmp.ne.s32.totalorder %s58, %s60
      %p67 = scmp.eq.s32.totalorder %s29, 1
      %p68 = por %p66, %p67
      %p69 = scmp.ne.s32.totalorder %s60, %s61
      %p70 = scmp.eq.s32.totalorder %s29, 0
      %p71 = por %p69, %p70
      %p72 = scmp.ne.s32.totalorder %s60, %s61
      %p73 = scmp.eq.s32.totalorder %s30, 1
      %p74 = por %p72, %p73
      %p76 = scmp.ne.s32.totalorder %s61, %s75
      %p77 = scmp.eq.s32.totalorder %s30, 0
      %p78 = por %p76, %p77
      %s80 = sadd.s32 %s79, 1
      %p83 = scmp.eq.s32.totalorder %s24, 1
      %p84 = scmp.ne.s32.totalorder %s79, %s81
      %p85 = scmp.eq.s32.totalorder %s24, 0
      %p86 = por %p84, %p85
      %p87 = scmp.ne.s32.totalorder %s79, %s81
      %p88 = scmp.eq.s32.totalorder %s29, 1
      %p89 = por %p87, %p88
      %p90 = scmp.ne.s32.totalorder %s81, %s82
      %p91 = scmp.eq.s32.totalorder %s29, 0
      %p92 = por %p90, %p91
      %p93 = scmp.ne.s32.totalorder %s81, %s82
      %p94 = scmp.eq.s32.totalorder %s30, 1
      %p95 = por %p93, %p94
      %p97 = scmp.ne.s32.totalorder %s82, %s96
      %p98 = scmp.eq.s32.totalorder %s30, 0
      %p99 = por %p97, %p98
      %s101 = sadd.s32 %s100, 1
      %p104 = scmp.eq.s32.totalorder %s24, 1
      %p105 = scmp.ne.s32.totalorder %s100, %s102
      %p106 = scmp.eq.s32.totalorder %s24, 0
      %p107 = por %p105, %p106
      %p108 = scmp.ne.s32.totalorder %s100, %s102
      %p109 = scmp.eq.s32.totalorder %s29, 1
      %p110 = por %p108, %p109
      %p111 = scmp.ne.s32.totalorder %s102, %s103
      %p112 = scmp.eq.s32.totalorder %s29, 0
      %p113 = por %p111, %p112
      %p114 = scmp.ne.s32.totalorder %s102, %s103
      %p115 = scmp.eq.s32.totalorder %s30, 1
      %p116 = por %p114, %p115
      %p118 = scmp.ne.s32.totalorder %s103, %s117
      %p119 = scmp.eq.s32.totalorder %s30, 0
      %p120 = por %p118, %p119
      %s122 = sadd.s32 %s121, 1
      %p125 = scmp.eq.s32.totalorder %s24, 1
      %p126 = scmp.ne.s32.totalorder %s121, %s123
      %p127 = scmp.eq.s32.totalorder %s24, 0
      %p128 = por %p126, %p127
      %p129 = scmp.ne.s32.totalorder %s121, %s123
      %p130 = scmp.eq.s32.totalorder %s29, 1
      %p131 = por %p129, %p130
      %p132 = scmp.ne.s32.totalorder %s123, %s124
      %p133 = scmp.eq.s32.totalorder %s29, 0
      %p134 = por %p132, %p133
      %p135 = scmp.ne.s32.totalorder %s123, %s124
      %p136 = scmp.eq.s32.totalorder %s30, 1
      %p137 = por %p135, %p136
      %p139 = scmp.ne.s32.totalorder %s124, %s138
      %p140 = scmp.eq.s32.totalorder %s30, 0
      %p141 = por %p139, %p140
      %s143 = sadd.s32 %s142, 1
      %p146 = scmp.eq.s32.totalorder %s24, 1
      %p147 = scmp.ne.s32.totalorder %s142, %s144
      %p148 = scmp.eq.s32.totalorder %s24, 0
      %p149 = por %p147, %p148
      %p150 = scmp.ne.s32.totalorder %s142, %s144
      %p151 = scmp.eq.s32.totalorder %s29, 1
      %p152 = por %p150, %p151
      %p153 = scmp.ne.s32.totalorder %s144, %s145
      %p154 = scmp.eq.s32.totalorder %s29, 0
      %p155 = por %p153, %p154
      %p156 = scmp.ne.s32.totalorder %s144, %s145
      %p157 = scmp.eq.s32.totalorder %s30, 1
      %p158 = por %p156, %p157
      %p160 = scmp.ne.s32.totalorder %s145, %s159
      %p161 = scmp.eq.s32.totalorder %s30, 0
      %p162 = por %p160, %p161
      %s164 = sadd.s32 %s163, 1
      %p167 = scmp.eq.s32.totalorder %s24, 1
      %p168 = scmp.ne.s32.totalorder %s163, %s165
      %p169 = scmp.eq.s32.totalorder %s24, 0
      %p170 = por %p168, %p169
      %p171 = scmp.ne.s32.totalorder %s163, %s165
      %p172 = scmp.eq.s32.totalorder %s29, 1
      %p173 = por %p171, %p172
      %p174 = scmp.ne.s32.totalorder %s165, %s166
      %p175 = scmp.eq.s32.totalorder %s29, 0
      %p176 = por %p174, %p175
      %p177 = scmp.ne.s32.totalorder %s165, %s166
      %p178 = scmp.eq.s32.totalorder %s30, 1
      %p179 = por %p177, %p178
      %p181 = scmp.ne.s32.totalorder %s166, %s180
      %p182 = scmp.eq.s32.totalorder %s30, 0
      %p183 = por %p181, %p182
      %s185 = sadd.s32 %s184, 1
      %p188 = scmp.eq.s32.totalorder %s24, 1
      %p189 = scmp.ne.s32.totalorder %s184, %s186
      %p190 = scmp.eq.s32.totalorder %s24, 0
      %p191 = por %p189, %p190
      %p192 = scmp.ne.s32.totalorder %s184, %s186
      %p193 = scmp.eq.s32.totalorder %s29, 1
      %p194 = por %p192, %p193
      %p195 = scmp.ne.s32.totalorder %s186, %s187
      %p196 = scmp.eq.s32.totalorder %s29, 0
      %p197 = por %p195, %p196
      %p198 = scmp.ne.s32.totalorder %s186, %s187
      %p199 = scmp.eq.s32.totalorder %s30, 1
      %p200 = por %p198, %p199
      %p202 = scmp.ne.s32.totalorder %s187, %s201
      %p203 = scmp.eq.s32.totalorder %s30, 0
      %p204 = por %p202, %p203
      %s206 = sadd.s32 %s205, 1
      %p209 = scmp.eq.s32.totalorder %s24, 1
      %p210 = scmp.ne.s32.totalorder %s205, %s207
      %p211 = scmp.eq.s32.totalorder %s24, 0
      %p212 = por %p210, %p211
      %p213 = scmp.ne.s32.totalorder %s205, %s207
      %p214 = scmp.eq.s32.totalorder %s29, 1
      %p215 = por %p213, %p214
      %p216 = scmp.ne.s32.totalorder %s207, %s208
      %p217 = scmp.eq.s32.totalorder %s29, 0
      %p218 = por %p216, %p217
      %p219 = scmp.ne.s32.totalorder %s207, %s208
      %p220 = scmp.eq.s32.totalorder %s30, 1
      %p221 = por %p219, %p220
      %p223 = scmp.ne.s32.totalorder %s208, %s222
      %p224 = scmp.eq.s32.totalorder %s30, 0
      %p225 = por %p223, %p224
      %s227 = sadd.s32 %s226, 1
      %p230 = scmp.eq.s32.totalorder %s24, 1
      %p231 = scmp.ne.s32.totalorder %s226, %s228
      %p232 = scmp.eq.s32.totalorder %s24, 0
      %p233 = por %p231, %p232
      %p234 = scmp.ne.s32.totalorder %s226, %s228
      %p235 = scmp.eq.s32.totalorder %s29, 1
      %p236 = por %p234, %p235
      %p237 = scmp.ne.s32.totalorder %s228, %s229
      %p238 = scmp.eq.s32.totalorder %s29, 0
      %p239 = por %p237, %p238
      %p240 = scmp.ne.s32.totalorder %s228, %s229
      %p241 = scmp.eq.s32.totalorder %s30, 1
      %p242 = por %p240, %p241
      %p244 = scmp.ne.s32.totalorder %s229, %s243
      %p245 = scmp.eq.s32.totalorder %s30, 0
      %p246 = por %p244, %p245
      %s247 = ssub.s32 %s24, %s31
      %p248 = scmp.eq.s32.totalorder %s247, 0
      %s250 = sadd.s32 %s249, 1
      %s251 = scalar_select %p248, %s249, %s250
      %p254 = pneg %p248
      %p255 = scmp.eq.s32.totalorder %s24, 1
      %p256 = por %p254, %p255
      %p257 = scmp.ne.s32.totalorder %s249, %s252
      %p258 = scmp.eq.s32.totalorder %s24, 0
      %p259 = por %p257, %p258
      %p260 = scmp.ne.s32.totalorder %s249, %s252
      %p261 = scmp.eq.s32.totalorder %s29, 1
      %p262 = por %p260, %p261
      %p263 = scmp.ne.s32.totalorder %s252, %s253
      %p264 = scmp.eq.s32.totalorder %s29, 0
      %p265 = por %p263, %p264
      %p266 = scmp.ne.s32.totalorder %s252, %s253
      %p267 = scmp.eq.s32.totalorder %s30, 1
      %p268 = por %p266, %p267
      %p270 = scmp.ne.s32.totalorder %s253, %s269
      %p271 = scmp.eq.s32.totalorder %s30, 0
      %p272 = por %p270, %p271
      %p273 = scmp.le.s32.totalorder 1, %s24
      %p274 = scmp.lt.s32.totalorder %s24, 3
      %p275 = pnand %p273, %p274
      %p276 = pneg %p275
      // Predicated region
      $region9: #{tpu_custom_call.1} parent=5 // pred_check
        _
      $region10: #{tpu_custom_call.1} parent=5 // pred_check_branch
        %278 = sbr.rel (%p275) target = $region12
      $region11: #{tpu_custom_call.1} parent=5 // pred_region
        %s279 = ssub.s32 %s24, 1
        // Predicated region
        $region13: #{tpu_custom_call.1} parent=11 // pred_check
          %p280 = pneg %p71
        $region14: #{tpu_custom_call.1} parent=11 // pred_check_branch
          %282 = sbr.rel (%p280) target = $region16
        $region15: #{tpu_custom_call.1} parent=11 // pred_region
          _
        $region16: #{tpu_custom_call.1} parent=11 // pred_fallthru
          _
        // Predicated region
        $region17: #{tpu_custom_call.1} parent=11 // pred_check
          %p283 = pneg %p92
        $region18: #{tpu_custom_call.1} parent=11 // pred_check_branch
          %285 = sbr.rel (%p283) target = $region20
        $region19: #{tpu_custom_call.1} parent=11 // pred_region
          %s287 = ssub.s32 18432, 18432
          %288 = vsyncadd [#allocation6], %s287
          %s289 = sshll.u32 [#allocation5], 4
          %s290 = int_to_ptr.vmem [resolvable:$true] %s289
          %295 = dma.hbm_to_vmem [thread:$0]  %s2, 18432, %s290, [#allocation6], 256, 256, 16
        $region20: #{tpu_custom_call.1} parent=11 // pred_fallthru
          _
        // Predicated region
        $region21: #{tpu_custom_call.1} parent=11 // pred_check
          %p296 = pneg %p113
        $region22: #{tpu_custom_call.1} parent=11 // pred_check_branch
          %298 = sbr.rel (%p296) target = $region24
        $region23: #{tpu_custom_call.1} parent=11 // pred_region
          %s300 = ssub.s32 2048, 2048
          %301 = vsyncadd [#allocation6], %s300
          %s302 = sshll.u32 [#allocation7], 4
          %s303 = int_to_ptr.vmem [resolvable:$true] %s302
          %308 = dma.hbm_to_vmem [thread:$0]  %s3, 2048, %s303, [#allocation6], 256, 256, 16
        $region24: #{tpu_custom_call.1} parent=11 // pred_fallthru
          _
        // Predicated region
        $region25: #{tpu_custom_call.1} parent=11 // pred_check
          %p309 = pneg %p134
        $region26: #{tpu_custom_call.1} parent=11 // pred_check_branch
          %311 = sbr.rel (%p309) target = $region28
        $region27: #{tpu_custom_call.1} parent=11 // pred_region
          %s313 = ssub.s32 4096, 4096
          %314 = vsyncadd [#allocation9], %s313
          %s315 = sshll.u32 [#allocation8], 4
          %s316 = int_to_ptr.vmem [resolvable:$true] %s315
          %321 = dma.hbm_to_vmem [thread:$0]  %s4, 4096, %s316, [#allocation9], 128, 128, 8
        $region28: #{tpu_custom_call.1} parent=11 // pred_fallthru
          _
        // Predicated region
        $region29: #{tpu_custom_call.1} parent=11 // pred_check
          %p322 = pneg %p155
        $region30: #{tpu_custom_call.1} parent=11 // pred_check_branch
          %324 = sbr.rel (%p322) target = $region32
        $region31: #{tpu_custom_call.1} parent=11 // pred_region
          %s326 = ssub.s32 4096, 4096
          %327 = vsyncadd [#allocation9], %s326
          %s328 = sshll.u32 [#allocation10], 4
          %s329 = int_to_ptr.vmem [resolvable:$true] %s328
          %334 = dma.hbm_to_vmem [thread:$0]  %s5, 4096, %s329, [#allocation9], 128, 128, 8
        $region32: #{tpu_custom_call.1} parent=11 // pred_fallthru
          _
        // Predicated region
        $region33: #{tpu_custom_call.1} parent=11 // pred_check
          %p335 = pneg %p176
        $region34: #{tpu_custom_call.1} parent=11 // pred_check_branch
          %337 = sbr.rel (%p335) target = $region36
        $region35: #{tpu_custom_call.1} parent=11 // pred_region
          _
        $region36: #{tpu_custom_call.1} parent=11 // pred_fallthru
          _
        // Predicated region
        $region37: #{tpu_custom_call.1} parent=11 // pred_check
          %p338 = pneg %p197
        $region38: #{tpu_custom_call.1} parent=11 // pred_check_branch
          %340 = sbr.rel (%p338) target = $region40
        $region39: #{tpu_custom_call.1} parent=11 // pred_region
          _
        $region40: #{tpu_custom_call.1} parent=11 // pred_fallthru
          _
        // Predicated region
        $region41: #{tpu_custom_call.1} parent=11 // pred_check
          %p341 = pneg %p218
        $region42: #{tpu_custom_call.1} parent=11 // pred_check_branch
          %343 = sbr.rel (%p341) target = $region44
        $region43: #{tpu_custom_call.1} parent=11 // pred_region
          _
        $region44: #{tpu_custom_call.1} parent=11 // pred_fallthru
          _
        // Predicated region
        $region45: #{tpu_custom_call.1} parent=11 // pred_check
          %p344 = pneg %p239
        $region46: #{tpu_custom_call.1} parent=11 // pred_check_branch
          %346 = sbr.rel (%p344) target = $region48
        $region47: #{tpu_custom_call.1} parent=11 // pred_region
          _
        $region48: #{tpu_custom_call.1} parent=11 // pred_fallthru
          _
      $region12: #{tpu_custom_call.1} parent=5 // pred_fallthru
        _
      %p347 = scmp.lt.s32.totalorder %s24, 2
      // Predicated region
      $region49: #{tpu_custom_call.1} parent=5 // pred_check
        %p348 = pneg %p347
      $region50: #{tpu_custom_call.1} parent=5 // pred_check_branch
        %350 = sbr.rel (%p348) target = $region52
      $region51: #{tpu_custom_call.1} parent=5 // pred_region
        // Predicated region
        $region53: #{tpu_custom_call.1} parent=51 // pred_check
          %p351 = pneg %p44
        $region54: #{tpu_custom_call.1} parent=51 // pred_check_branch
          %353 = sbr.rel (%p351) target = $region56
        $region55: #{tpu_custom_call.1} parent=51 // pred_region
          %s354 = sand.u32 %s34, 1
          %s355 = scalar_lea.sflag [#allocation3], %s354
          %s356 = sand.u32 %s34, 1
          %s357 = smul.addr %s356, 64
          %s358 = scalar_lea.vmem [#allocation2], %s357
          %s360 = ssub.s32 1024, 1024
          %361 = vsyncadd %s355, %s360
          %s362 = smul.addr %s24, 8
          %s363 = smul.addr %s362, 128
          %s364 = scalar_lea.hbm %s0, %s363
          %s365 = sshll.u32 %s358, 4
          %s366 = int_to_ptr.vmem [resolvable:$true] %s365
          %371 = dma.hbm_to_vmem [thread:$0]  %s364, 1024, %s366, %s355, 256, 256, 16
        $region56: #{tpu_custom_call.1} parent=51 // pred_fallthru
          _
      $region52: #{tpu_custom_call.1} parent=5 // pred_fallthru
        _
      %p372 = scmp.le.s32.totalorder 1, %s24
      %p373 = scmp.lt.s32.totalorder %s24, 3
      %p374 = pnand %p372, %p373
      %p375 = pneg %p374
      // Predicated region
      $region57: #{tpu_custom_call.1} parent=5 // pred_check
        _
      $region58: #{tpu_custom_call.1} parent=5 // pred_check_branch
        %377 = sbr.rel (%p374) target = $region60
      $region59: #{tpu_custom_call.1} parent=5 // pred_region
        %s378 = ssub.s32 %s24, 1
        %s379 = sand.u32 %s37, 1
        %s380 = scalar_lea.sflag [#allocation3], %s379
        %s381 = sand.u32 %s37, 1
        %s382 = smul.addr %s381, 64
        %s383 = scalar_lea.vmem [#allocation2], %s382
        // Predicated region
        $region61: #{tpu_custom_call.1} parent=59 // pred_check
          %p384 = pneg %p50
        $region62: #{tpu_custom_call.1} parent=59 // pred_check_branch
          %386 = sbr.rel (%p384) target = $region64
        $region63: #{tpu_custom_call.1} parent=59 // pred_region
          %387 = dma.done %s380, 1024
        $region64: #{tpu_custom_call.1} parent=59 // pred_fallthru
          _
        // Predicated region
        $region65: #{tpu_custom_call.1} parent=59 // pred_check
          %p388 = pneg %p92
        $region66: #{tpu_custom_call.1} parent=59 // pred_check_branch
          %390 = sbr.rel (%p388) target = $region68
        $region67: #{tpu_custom_call.1} parent=59 // pred_region
          %391 = dma.done [#allocation6], 18432
        $region68: #{tpu_custom_call.1} parent=59 // pred_fallthru
          _
        // Predicated region
        $region69: #{tpu_custom_call.1} parent=59 // pred_check
          %p392 = pneg %p113
        $region70: #{tpu_custom_call.1} parent=59 // pred_check_branch
          %394 = sbr.rel (%p392) target = $region72
        $region71: #{tpu_custom_call.1} parent=59 // pred_region
          %395 = dma.done [#allocation6], 2048
        $region72: #{tpu_custom_call.1} parent=59 // pred_fallthru
          _
        // Predicated region
        $region73: #{tpu_custom_call.1} parent=59 // pred_check
          %p396 = pneg %p134
        $region74: #{tpu_custom_call.1} parent=59 // pred_check_branch
          %398 = sbr.rel (%p396) target = $region76
        $region75: #{tpu_custom_call.1} parent=59 // pred_region
          %399 = dma.done [#allocation9], 4096
        $region76: #{tpu_custom_call.1} parent=59 // pred_fallthru
          _
        // Predicated region
        $region77: #{tpu_custom_call.1} parent=59 // pred_check
          %p400 = pneg %p155
        $region78: #{tpu_custom_call.1} parent=59 // pred_check_branch
          %402 = sbr.rel (%p400) target = $region80
        $region79: #{tpu_custom_call.1} parent=59 // pred_region
          %403 = dma.done [#allocation9], 4096
        $region80: #{tpu_custom_call.1} parent=59 // pred_fallthru
          _
        %s404 = sand.u32 %s37, 1
        %s405 = scalar_lea.sflag [#allocation3], %s404
        %s406 = sand.u32 %s37, 1
        %s407 = smul.addr %s406, 64
        %s408 = scalar_lea.vmem [#allocation2], %s407
        %p409 = pneg %p50
        %p410 = pneg %p47
        %p411 = pneg %p71
        %p412 = pneg %p68
        %p413 = pneg %p92
        %p414 = pneg %p89
        %p415 = pneg %p113
        %p416 = pneg %p110
        %p417 = pneg %p134
        %p418 = pneg %p131
        %p419 = pneg %p155
        %p420 = pneg %p152
        %p421 = pneg %p176
        %p422 = pneg %p173
        %p423 = pneg %p197
        %p424 = pneg %p194
        %p425 = pneg %p218
        %p426 = pneg %p215
        %p427 = pneg %p239
        %p428 = pneg %p236
        %p429 = pneg %p265
        %p430 = pneg %p262
        %s431 = sand.u32 %s252, 1
        %s432 = scalar_lea.sflag [#allocation4], %s431
        %s433 = sand.u32 %s252, 1
        %s434 = smul.addr %s433, 64
        %s435 = scalar_lea.vmem [#allocation11], %s434
        %v437 = vld [vmem:[%s383] sm:$0xff]
        %v438 = vld [vmem:[%s383 + $0x8] sm:$0xff]
        %v439 = vld [vmem:[%s383 + $0x10] sm:$0xff]
        %v440 = vld [vmem:[%s383 + $0x18] sm:$0xff]
        %v441 = vld [vmem:[%s383 + $0x20] sm:$0xff]
        %v442 = vld [vmem:[%s383 + $0x28] sm:$0xff]
        %v443 = vld [vmem:[%s383 + $0x30] sm:$0xff]
        %v444 = vld [vmem:[%s383 + $0x38] sm:$0xff]
        %v445 = vpack.c.bf16 %v439, %v437
        %v446 = vpack.c.bf16 %v440, %v438
        %v447 = vpack.c.bf16 %v443, %v441
        %v448 = vpack.c.bf16 %v444, %v442
        %v449 = vld [vmem:[%s1] sm:$0xf]
        %v450 = vld [vmem:[%s1 + $0x4] sm:$0xf]
        %v451 = vld [vmem:[%s1 + $0x8] sm:$0xf]
        %v452 = vld [vmem:[%s1 + $0xc] sm:$0xf]
        %v453 = vld [vmem:[%s1 + $0x10] sm:$0xf]
        %v454 = vld [vmem:[%s1 + $0x14] sm:$0xf]
        %v455 = vld [vmem:[%s1 + $0x18] sm:$0xf]
        %v456 = vld [vmem:[%s1 + $0x1c] sm:$0xf]
        %v465 = vunpack.c.l.b16 %v449
        %v466 = vunpack.c.l.b16 %v450
        %v467 = vunpack.c.l.b16 %v451
        %v468 = vunpack.c.l.b16 %v452
        %v469 = vunpack.c.l.b16 %v453
        %v470 = vunpack.c.l.b16 %v454
        %v471 = vunpack.c.l.b16 %v455
        %v472 = vunpack.c.l.b16 %v456
        %v473 = vpack.c.b16 %v466, %v465
        %v474 = vpack.c.b16 %v468, %v467
        %v475 = vpack.c.b16 %v470, %v469
        %v476 = vpack.c.b16 %v472, %v471
        %vm477 = vcmask 261120
        %v479 = vsel %vm477, %v473, 0
        %v482 = vsel %vm477, %v474, 0
        %v485 = vsel %vm477, %v475, 0
        %v488 = vsel %vm477, %v476, 0
        %490 = vmatprep.subr.bf16.mxu0 %v446
        %491 = vmatpush1.bf16.msra.mxu0 %v445
        %492 = vmatprep.subr.bf16.mxu0 %v448
        %493 = vmatpush1.bf16.msra.mxu0 %v447
        %494 = vmatprep.subr.bf16.mxu0 0
        %495 = vmatpush1.bf16.msra.mxu0 0
        %496 = vmatprep.subr.bf16.mxu0 0
        %497 = vmatpush1.bf16.msra.mxu0 0
        %498 = vmatprep.subr.bf16.mxu0 0
        %499 = vmatpush1.bf16.msra.mxu0 0
        %500 = vmatprep.subr.bf16.mxu0 0
        %501 = vmatpush1.bf16.msra.mxu0 0
        %502 = vmatprep.subr.bf16.mxu0 0
        %503 = vmatpush1.bf16.msra.mxu0 0
        %504 = vmatprep.subr.bf16.mxu0 0
        %505 = vmatpush1.bf16.msra.mxu0 0
        %506 = vmatprep.subr.bf16.mxu0 0
        %507 = vmatpush1.bf16.msra.mxu0 0
        %508 = vmatprep.subr.bf16.mxu0 0
        %509 = vmatpush1.bf16.msra.mxu0 0
        %510 = vmatprep.subr.bf16.mxu0 0
        %511 = vmatpush1.bf16.msra.mxu0 0
        %512 = vmatprep.subr.bf16.mxu0 0
        %513 = vmatpush1.bf16.msra.mxu0 0
        %514 = vmatprep.subr.bf16.mxu0 0
        %515 = vmatpush1.bf16.msra.mxu0 0
        %516 = vmatprep.subr.bf16.mxu0 0
        %517 = vmatpush1.bf16.msra.mxu0 0
        %518 = vmatprep.subr.bf16.mxu0 0
        %519 = vmatpush1.bf16.msra.mxu0 0
        %520 = vmatprep.subr.bf16.mxu0 0
        %521 = vmatpush1.bf16.msra.mxu0 0
        %522 = vmatprep.mubr.bf16.mxu0 0
        %523 = vmatmul.mubr.bf16.gmra.mrb[0].mxu0 %v479
        %v524 = vpop.f32.mrb[0].mxu0
        %v525 = vadd.f32 0.0, %v524
        %v526 = vpop.f32.mrb[0].mxu0
        %v527 = vadd.f32 0.0, %v526
        %v528 = vpop.f32.mrb[0].mxu0
        %v529 = vadd.f32 0.0, %v528
        %v530 = vpop.f32.mrb[0].mxu0
        %v531 = vadd.f32 0.0, %v530
        %532 = vmatprep.mubr.bf16.mxu0 0
        %533 = vmatmul.mubr.bf16.gmra.mrb[0].mxu0 %v482
        %v534 = vpop.f32.mrb[0].mxu0
        %v535 = vadd.f32 0.0, %v534
        %v536 = vpop.f32.mrb[0].mxu0
        %v537 = vadd.f32 0.0, %v536
        %v538 = vpop.f32.mrb[0].mxu0
        %v539 = vadd.f32 0.0, %v538
        %v540 = vpop.f32.mrb[0].mxu0
        %v541 = vadd.f32 0.0, %v540
        %542 = vmatprep.mubr.bf16.mxu0 0
        %543 = vmatmul.mubr.bf16.gmra.mrb[0].mxu0 %v485
        %v544 = vpop.f32.mrb[0].mxu0
        %v545 = vadd.f32 0.0, %v544
        %v546 = vpop.f32.mrb[0].mxu0
        %v547 = vadd.f32 0.0, %v546
        %v548 = vpop.f32.mrb[0].mxu0
        %v549 = vadd.f32 0.0, %v548
        %v550 = vpop.f32.mrb[0].mxu0
        %v551 = vadd.f32 0.0, %v550
        %552 = vmatprep.mubr.bf16.mxu0 0
        %553 = vmatmul.mubr.bf16.gmra.mrb[0].mxu0 %v488
        %v554 = vpop.f32.mrb[0].mxu0
        %v555 = vadd.f32 0.0, %v554
        %v556 = vpop.f32.mrb[0].mxu0
        %v557 = vadd.f32 0.0, %v556
        %v558 = vpop.f32.mrb[0].mxu0
        %v559 = vadd.f32 0.0, %v558
        %v560 = vpop.f32.mrb[0].mxu0
        %v561 = vadd.f32 0.0, %v560
        %562 = vdwg.mxu0
        %s563 = scalar_lea.vmem [#allocation5], 512
        %v564 = vld [vmem:[%s563] sm:$0xff]
        %v565 = vld [vmem:[%s563 + $0x8] sm:$0xff]
        %v566 = vld [vmem:[%s563 + $0x10] sm:$0xff]
        %v567 = vld [vmem:[%s563 + $0x18] sm:$0xff]
        %v568 = vld [vmem:[%s563 + $0x20] sm:$0xff]
        %v569 = vld [vmem:[%s563 + $0x28] sm:$0xff]
        %v570 = vld [vmem:[%s563 + $0x30] sm:$0xff]
        %v571 = vld [vmem:[%s563 + $0x38] sm:$0xff]
        %v572 = vld [vmem:[%s563 + $0x40] sm:$0xff]
        %v573 = vld [vmem:[%s563 + $0x48] sm:$0xff]
        %v574 = vld [vmem:[%s563 + $0x50] sm:$0xff]
        %v575 = vld [vmem:[%s563 + $0x58] sm:$0xff]
        %v576 = vld [vmem:[%s563 + $0x60] sm:$0xff]
        %v577 = vld [vmem:[%s563 + $0x68] sm:$0xff]
        %v578 = vld [vmem:[%s563 + $0x70] sm:$0xff]
        %v579 = vld [vmem:[%s563 + $0x78] sm:$0xff]
        %v580 = vmul.f32 %v525, %v564
        %v581 = vmul.f32 %v527, %v565
        %v582 = vmul.f32 %v529, %v566
        %v583 = vmul.f32 %v531, %v567
        %v584 = vmul.f32 %v535, %v568
        %v585 = vmul.f32 %v537, %v569
        %v586 = vmul.f32 %v539, %v570
        %v587 = vmul.f32 %v541, %v571
        %v588 = vmul.f32 %v545, %v572
        %v589 = vmul.f32 %v547, %v573
        %v590 = vmul.f32 %v549, %v574
        %v591 = vmul.f32 %v551, %v575
        %v592 = vmul.f32 %v555, %v576
        %v593 = vmul.f32 %v557, %v577
        %v594 = vmul.f32 %v559, %v578
        %v595 = vmul.f32 %v561, %v579
        %596 = vrot.lane.b32.xlu0 %v525, 17
        %v597 = vpop.permute.xlu0 %596
        %598 = vrot.lane.b32.xlu0 %v529, 17
        %v599 = vpop.permute.xlu0 %598
        %600 = vrot.lane.b32.xlu0 %v535, 17
        %v601 = vpop.permute.xlu0 %600
        %602 = vrot.lane.b32.xlu0 %v539, 17
        %v603 = vpop.permute.xlu0 %602
        %604 = vrot.lane.b32.xlu0 %v545, 17
        %v605 = vpop.permute.xlu0 %604
        %606 = vrot.lane.b32.xlu0 %v549, 17
        %v607 = vpop.permute.xlu0 %606
        %608 = vrot.lane.b32.xlu0 %v555, 17
        %v609 = vpop.permute.xlu0 %608
        %610 = vrot.lane.b32.xlu0 %v559, 17
        %v611 = vpop.permute.xlu0 %610
        %612 = vrot.lane.b32.xlu0 %v527, 17
        %v613 = vpop.permute.xlu0 %612
        %614 = vrot.lane.b32.xlu0 %v531, 17
        %v615 = vpop.permute.xlu0 %614
        %616 = vrot.lane.b32.xlu0 %v537, 17
        %v617 = vpop.permute.xlu0 %616
        %618 = vrot.lane.b32.xlu0 %v541, 17
        %v619 = vpop.permute.xlu0 %618
        %620 = vrot.lane.b32.xlu0 %v547, 17
        %v621 = vpop.permute.xlu0 %620
        %622 = vrot.lane.b32.xlu0 %v551, 17
        %v623 = vpop.permute.xlu0 %622
        %624 = vrot.lane.b32.xlu0 %v557, 17
        %v625 = vpop.permute.xlu0 %624
        %626 = vrot.lane.b32.xlu0 %v561, 17
        %v627 = vpop.permute.xlu0 %626
        %v628 = vlaneseq
        %v629 = vand.u32 %v628, 127
        %vm630 = vcmp.lt.s32.totalorder %v629, 17
        %v631 = vsel %vm630, %v597, %v613
        %v632 = vsel %vm630, %v599, %v615
        %v633 = vsel %vm630, %v601, %v617
        %v634 = vsel %vm630, %v603, %v619
        %v635 = vsel %vm630, %v605, %v621
        %v636 = vsel %vm630, %v607, %v623
        %v637 = vsel %vm630, %v609, %v625
        %v638 = vsel %vm630, %v611, %v627
        %v639 = vsel %vm630, %v613, %v597
        %v640 = vsel %vm630, %v615, %v599
        %v641 = vsel %vm630, %v617, %v601
        %v642 = vsel %vm630, %v619, %v603
        %v643 = vsel %vm630, %v621, %v605
        %v644 = vsel %vm630, %v623, %v607
        %v645 = vsel %vm630, %v625, %v609
        %v646 = vsel %vm630, %v627, %v611
        %v647 = vld [vmem:[#allocation5] sm:$0xff]
        %v648 = vld [vmem:[#allocation5 + $0x8] sm:$0xff]
        %v649 = vld [vmem:[#allocation5 + $0x10] sm:$0xff]
        %v650 = vld [vmem:[#allocation5 + $0x18] sm:$0xff]
        %v651 = vld [vmem:[#allocation5 + $0x20] sm:$0xff]
        %v652 = vld [vmem:[#allocation5 + $0x28] sm:$0xff]
        %v653 = vld [vmem:[#allocation5 + $0x30] sm:$0xff]
        %v654 = vld [vmem:[#allocation5 + $0x38] sm:$0xff]
        %v655 = vld [vmem:[#allocation5 + $0x40] sm:$0xff]
        %v656 = vld [vmem:[#allocation5 + $0x48] sm:$0xff]
        %v657 = vld [vmem:[#allocation5 + $0x50] sm:$0xff]
        %v658 = vld [vmem:[#allocation5 + $0x58] sm:$0xff]
        %v659 = vld [vmem:[#allocation5 + $0x60] sm:$0xff]
        %v660 = vld [vmem:[#allocation5 + $0x68] sm:$0xff]
        %v661 = vld [vmem:[#allocation5 + $0x70] sm:$0xff]
        %v662 = vld [vmem:[#allocation5 + $0x78] sm:$0xff]
        %v663 = vmul.f32 %v639, %v647
        %v664 = vmul.f32 %v631, %v648
        %v665 = vmul.f32 %v640, %v649
        %v666 = vmul.f32 %v632, %v650
        %v667 = vmul.f32 %v641, %v651
        %v668 = vmul.f32 %v633, %v652
        %v669 = vmul.f32 %v642, %v653
        %v670 = vmul.f32 %v634, %v654
        %v671 = vmul.f32 %v643, %v655
        %v672 = vmul.f32 %v635, %v656
        %v673 = vmul.f32 %v644, %v657
        %v674 = vmul.f32 %v636, %v658
        %v675 = vmul.f32 %v645, %v659
        %v676 = vmul.f32 %v637, %v660
        %v677 = vmul.f32 %v646, %v661
        %v678 = vmul.f32 %v638, %v662
        %v679 = vadd.f32 %v580, %v663
        %v680 = vadd.f32 %v581, %v664
        %v681 = vadd.f32 %v582, %v665
        %v682 = vadd.f32 %v583, %v666
        %v683 = vadd.f32 %v584, %v667
        %v684 = vadd.f32 %v585, %v668
        %v685 = vadd.f32 %v586, %v669
        %v686 = vadd.f32 %v587, %v670
        %v687 = vadd.f32 %v588, %v671
        %v688 = vadd.f32 %v589, %v672
        %v689 = vadd.f32 %v590, %v673
        %v690 = vadd.f32 %v591, %v674
        %v691 = vadd.f32 %v592, %v675
        %v692 = vadd.f32 %v593, %v676
        %v693 = vadd.f32 %v594, %v677
        %v694 = vadd.f32 %v595, %v678
        %695 = vrot.lane.b32.xlu0 %v525, 16
        %v696 = vpop.permute.xlu0 %695
        %697 = vrot.lane.b32.xlu0 %v529, 16
        %v698 = vpop.permute.xlu0 %697
        %699 = vrot.lane.b32.xlu0 %v535, 16
        %v700 = vpop.permute.xlu0 %699
        %701 = vrot.lane.b32.xlu0 %v539, 16
        %v702 = vpop.permute.xlu0 %701
        %703 = vrot.lane.b32.xlu0 %v545, 16
        %v704 = vpop.permute.xlu0 %703
        %705 = vrot.lane.b32.xlu0 %v549, 16
        %v706 = vpop.permute.xlu0 %705
        %707 = vrot.lane.b32.xlu0 %v555, 16
        %v708 = vpop.permute.xlu0 %707
        %709 = vrot.lane.b32.xlu0 %v559, 16
        %v710 = vpop.permute.xlu0 %709
        %711 = vrot.lane.b32.xlu0 %v527, 16
        %v712 = vpop.permute.xlu0 %711
        %713 = vrot.lane.b32.xlu0 %v531, 16
        %v714 = vpop.permute.xlu0 %713
        %715 = vrot.lane.b32.xlu0 %v537, 16
        %v716 = vpop.permute.xlu0 %715
        %717 = vrot.lane.b32.xlu0 %v541, 16
        %v718 = vpop.permute.xlu0 %717
        %719 = vrot.lane.b32.xlu0 %v547, 16
        %v720 = vpop.permute.xlu0 %719
        %721 = vrot.lane.b32.xlu0 %v551, 16
        %v722 = vpop.permute.xlu0 %721
        %723 = vrot.lane.b32.xlu0 %v557, 16
        %v724 = vpop.permute.xlu0 %723
        %725 = vrot.lane.b32.xlu0 %v561, 16
        %v726 = vpop.permute.xlu0 %725
        %vm727 = vcmp.lt.s32.totalorder %v629, 16
        %v728 = vsel %vm727, %v696, %v712
        %v729 = vsel %vm727, %v698, %v714
        %v730 = vsel %vm727, %v700, %v716
        %v731 = vsel %vm727, %v702, %v718
        %v732 = vsel %vm727, %v704, %v720
        %v733 = vsel %vm727, %v706, %v722
        %v734 = vsel %vm727, %v708, %v724
        %v735 = vsel %vm727, %v710, %v726
        %v736 = vsel %vm727, %v712, %v696
        %v737 = vsel %vm727, %v714, %v698
        %v738 = vsel %vm727, %v716, %v700
        %v739 = vsel %vm727, %v718, %v702
        %v740 = vsel %vm727, %v720, %v704
        %v741 = vsel %vm727, %v722, %v706
        %v742 = vsel %vm727, %v724, %v708
        %v743 = vsel %vm727, %v726, %v710
        %s744 = scalar_lea.vmem [#allocation5], 128
        %v745 = vld [vmem:[%s744] sm:$0xff]
        %v746 = vld [vmem:[%s744 + $0x8] sm:$0xff]
        %v747 = vld [vmem:[%s744 + $0x10] sm:$0xff]
        %v748 = vld [vmem:[%s744 + $0x18] sm:$0xff]
        %v749 = vld [vmem:[%s744 + $0x20] sm:$0xff]
        %v750 = vld [vmem:[%s744 + $0x28] sm:$0xff]
        %v751 = vld [vmem:[%s744 + $0x30] sm:$0xff]
        %v752 = vld [vmem:[%s744 + $0x38] sm:$0xff]
        %v753 = vld [vmem:[%s744 + $0x40] sm:$0xff]
        %v754 = vld [vmem:[%s744 + $0x48] sm:$0xff]
        %v755 = vld [vmem:[%s744 + $0x50] sm:$0xff]
        %v756 = vld [vmem:[%s744 + $0x58] sm:$0xff]
        %v757 = vld [vmem:[%s744 + $0x60] sm:$0xff]
        %v758 = vld [vmem:[%s744 + $0x68] sm:$0xff]
        %v759 = vld [vmem:[%s744 + $0x70] sm:$0xff]
        %v760 = vld [vmem:[%s744 + $0x78] sm:$0xff]
        %v761 = vmul.f32 %v736, %v745
        %v762 = vmul.f32 %v728, %v746
        %v763 = vmul.f32 %v737, %v747
        %v764 = vmul.f32 %v729, %v748
        %v765 = vmul.f32 %v738, %v749
        %v766 = vmul.f32 %v730, %v750
        %v767 = vmul.f32 %v739, %v751
        %v768 = vmul.f32 %v731, %v752
        %v769 = vmul.f32 %v740, %v753
        %v770 = vmul.f32 %v732, %v754
        %v771 = vmul.f32 %v741, %v755
        %v772 = vmul.f32 %v733, %v756
        %v773 = vmul.f32 %v742, %v757
        %v774 = vmul.f32 %v734, %v758
        %v775 = vmul.f32 %v743, %v759
        %v776 = vmul.f32 %v735, %v760
        %v777 = vadd.f32 %v679, %v761
        %v778 = vadd.f32 %v680, %v762
        %v779 = vadd.f32 %v681, %v763
        %v780 = vadd.f32 %v682, %v764
        %v781 = vadd.f32 %v683, %v765
        %v782 = vadd.f32 %v684, %v766
        %v783 = vadd.f32 %v685, %v767
        %v784 = vadd.f32 %v686, %v768
        %v785 = vadd.f32 %v687, %v769
        %v786 = vadd.f32 %v688, %v770
        %v787 = vadd.f32 %v689, %v771
        %v788 = vadd.f32 %v690, %v772
        %v789 = vadd.f32 %v691, %v773
        %v790 = vadd.f32 %v692, %v774
        %v791 = vadd.f32 %v693, %v775
        %v792 = vadd.f32 %v694, %v776
        %793 = vrot.lane.b32.xlu0 %v525, 15
        %v794 = vpop.permute.xlu0 %793
        %795 = vrot.lane.b32.xlu0 %v529, 15
        %v796 = vpop.permute.xlu0 %795
        %797 = vrot.lane.b32.xlu0 %v535, 15
        %v798 = vpop.permute.xlu0 %797
        %799 = vrot.lane.b32.xlu0 %v539, 15
        %v800 = vpop.permute.xlu0 %799
        %801 = vrot.lane.b32.xlu0 %v545, 15
        %v802 = vpop.permute.xlu0 %801
        %803 = vrot.lane.b32.xlu0 %v549, 15
        %v804 = vpop.permute.xlu0 %803
        %805 = vrot.lane.b32.xlu0 %v555, 15
        %v806 = vpop.permute.xlu0 %805
        %807 = vrot.lane.b32.xlu0 %v559, 15
        %v808 = vpop.permute.xlu0 %807
        %809 = vrot.lane.b32.xlu0 %v527, 15
        %v810 = vpop.permute.xlu0 %809
        %811 = vrot.lane.b32.xlu0 %v531, 15
        %v812 = vpop.permute.xlu0 %811
        %813 = vrot.lane.b32.xlu0 %v537, 15
        %v814 = vpop.permute.xlu0 %813
        %815 = vrot.lane.b32.xlu0 %v541, 15
        %v816 = vpop.permute.xlu0 %815
        %817 = vrot.lane.b32.xlu0 %v547, 15
        %v818 = vpop.permute.xlu0 %817
        %819 = vrot.lane.b32.xlu0 %v551, 15
        %v820 = vpop.permute.xlu0 %819
        %821 = vrot.lane.b32.xlu0 %v557, 15
        %v822 = vpop.permute.xlu0 %821
        %823 = vrot.lane.b32.xlu0 %v561, 15
        %v824 = vpop.permute.xlu0 %823
        %vm825 = vcmp.lt.s32.totalorder %v629, 15
        %v826 = vsel %vm825, %v794, %v810
        %v827 = vsel %vm825, %v796, %v812
        %v828 = vsel %vm825, %v798, %v814
        %v829 = vsel %vm825, %v800, %v816
        %v830 = vsel %vm825, %v802, %v818
        %v831 = vsel %vm825, %v804, %v820
        %v832 = vsel %vm825, %v806, %v822
        %v833 = vsel %vm825, %v808, %v824
        %v834 = vsel %vm825, %v810, %v794
        %v835 = vsel %vm825, %v812, %v796
        %v836 = vsel %vm825, %v814, %v798
        %v837 = vsel %vm825, %v816, %v800
        %v838 = vsel %vm825, %v818, %v802
        %v839 = vsel %vm825, %v820, %v804
        %v840 = vsel %vm825, %v822, %v806
        %v841 = vsel %vm825, %v824, %v808
        %s842 = scalar_lea.vmem [#allocation5], 256
        %v843 = vld [vmem:[%s842] sm:$0xff]
        %v844 = vld [vmem:[%s842 + $0x8] sm:$0xff]
        %v845 = vld [vmem:[%s842 + $0x10] sm:$0xff]
        %v846 = vld [vmem:[%s842 + $0x18] sm:$0xff]
        %v847 = vld [vmem:[%s842 + $0x20] sm:$0xff]
        %v848 = vld [vmem:[%s842 + $0x28] sm:$0xff]
        %v849 = vld [vmem:[%s842 + $0x30] sm:$0xff]
        %v850 = vld [vmem:[%s842 + $0x38] sm:$0xff]
        %v851 = vld [vmem:[%s842 + $0x40] sm:$0xff]
        %v852 = vld [vmem:[%s842 + $0x48] sm:$0xff]
        %v853 = vld [vmem:[%s842 + $0x50] sm:$0xff]
        %v854 = vld [vmem:[%s842 + $0x58] sm:$0xff]
        %v855 = vld [vmem:[%s842 + $0x60] sm:$0xff]
        %v856 = vld [vmem:[%s842 + $0x68] sm:$0xff]
        %v857 = vld [vmem:[%s842 + $0x70] sm:$0xff]
        %v858 = vld [vmem:[%s842 + $0x78] sm:$0xff]
        %v859 = vmul.f32 %v834, %v843
        %v860 = vmul.f32 %v826, %v844
        %v861 = vmul.f32 %v835, %v845
        %v862 = vmul.f32 %v827, %v846
        %v863 = vmul.f32 %v836, %v847
        %v864 = vmul.f32 %v828, %v848
        %v865 = vmul.f32 %v837, %v849
        %v866 = vmul.f32 %v829, %v850
        %v867 = vmul.f32 %v838, %v851
        %v868 = vmul.f32 %v830, %v852
        %v869 = vmul.f32 %v839, %v853
        %v870 = vmul.f32 %v831, %v854
        %v871 = vmul.f32 %v840, %v855
        %v872 = vmul.f32 %v832, %v856
        %v873 = vmul.f32 %v841, %v857
        %v874 = vmul.f32 %v833, %v858
        %v875 = vadd.f32 %v777, %v859
        %v876 = vadd.f32 %v778, %v860
        %v877 = vadd.f32 %v779, %v861
        %v878 = vadd.f32 %v780, %v862
        %v879 = vadd.f32 %v781, %v863
        %v880 = vadd.f32 %v782, %v864
        %v881 = vadd.f32 %v783, %v865
        %v882 = vadd.f32 %v784, %v866
        %v883 = vadd.f32 %v785, %v867
        %v884 = vadd.f32 %v786, %v868
        %v885 = vadd.f32 %v787, %v869
        %v886 = vadd.f32 %v788, %v870
        %v887 = vadd.f32 %v789, %v871
        %v888 = vadd.f32 %v790, %v872
        %v889 = vadd.f32 %v791, %v873
        %v890 = vadd.f32 %v792, %v874
        %891 = vrot.lane.b32.xlu0 %v525, 1
        %v892 = vpop.permute.xlu0 %891
        %893 = vrot.lane.b32.xlu0 %v529, 1
        %v894 = vpop.permute.xlu0 %893
        %895 = vrot.lane.b32.xlu0 %v535, 1
        %v896 = vpop.permute.xlu0 %895
        %897 = vrot.lane.b32.xlu0 %v539, 1
        %v898 = vpop.permute.xlu0 %897
        %899 = vrot.lane.b32.xlu0 %v545, 1
        %v900 = vpop.permute.xlu0 %899
        %901 = vrot.lane.b32.xlu0 %v549, 1
        %v902 = vpop.permute.xlu0 %901
        %903 = vrot.lane.b32.xlu0 %v555, 1
        %v904 = vpop.permute.xlu0 %903
        %905 = vrot.lane.b32.xlu0 %v559, 1
        %v906 = vpop.permute.xlu0 %905
        %907 = vrot.lane.b32.xlu0 %v527, 1
        %v908 = vpop.permute.xlu0 %907
        %909 = vrot.lane.b32.xlu0 %v531, 1
        %v910 = vpop.permute.xlu0 %909
        %911 = vrot.lane.b32.xlu0 %v537, 1
        %v912 = vpop.permute.xlu0 %911
        %913 = vrot.lane.b32.xlu0 %v541, 1
        %v914 = vpop.permute.xlu0 %913
        %915 = vrot.lane.b32.xlu0 %v547, 1
        %v916 = vpop.permute.xlu0 %915
        %917 = vrot.lane.b32.xlu0 %v551, 1
        %v918 = vpop.permute.xlu0 %917
        %919 = vrot.lane.b32.xlu0 %v557, 1
        %v920 = vpop.permute.xlu0 %919
        %921 = vrot.lane.b32.xlu0 %v561, 1
        %v922 = vpop.permute.xlu0 %921
        %vm923 = vcmp.lt.s32.totalorder %v629, 1
        %v924 = vsel %vm923, %v892, %v908
        %v925 = vsel %vm923, %v894, %v910
        %v926 = vsel %vm923, %v896, %v912
        %v927 = vsel %vm923, %v898, %v914
        %v928 = vsel %vm923, %v900, %v916
        %v929 = vsel %vm923, %v902, %v918
        %v930 = vsel %vm923, %v904, %v920
        %v931 = vsel %vm923, %v906, %v922
        %v932 = vsel %vm923, %v908, %v892
        %v933 = vsel %vm923, %v910, %v894
        %v934 = vsel %vm923, %v912, %v896
        %v935 = vsel %vm923, %v914, %v898
        %v936 = vsel %vm923, %v916, %v900
        %v937 = vsel %vm923, %v918, %v902
        %v938 = vsel %vm923, %v920, %v904
        %v939 = vsel %vm923, %v922, %v906
        %s940 = scalar_lea.vmem [#allocation5], 384
        %v941 = vld [vmem:[%s940] sm:$0xff]
        %v942 = vld [vmem:[%s940 + $0x8] sm:$0xff]
        %v943 = vld [vmem:[%s940 + $0x10] sm:$0xff]
        %v944 = vld [vmem:[%s940 + $0x18] sm:$0xff]
        %v945 = vld [vmem:[%s940 + $0x20] sm:$0xff]
        %v946 = vld [vmem:[%s940 + $0x28] sm:$0xff]
        %v947 = vld [vmem:[%s940 + $0x30] sm:$0xff]
        %v948 = vld [vmem:[%s940 + $0x38] sm:$0xff]
        %v949 = vld [vmem:[%s940 + $0x40] sm:$0xff]
        %v950 = vld [vmem:[%s940 + $0x48] sm:$0xff]
        %v951 = vld [vmem:[%s940 + $0x50] sm:$0xff]
        %v952 = vld [vmem:[%s940 + $0x58] sm:$0xff]
        %v953 = vld [vmem:[%s940 + $0x60] sm:$0xff]
        %v954 = vld [vmem:[%s940 + $0x68] sm:$0xff]
        %v955 = vld [vmem:[%s940 + $0x70] sm:$0xff]
        %v956 = vld [vmem:[%s940 + $0x78] sm:$0xff]
        %v957 = vmul.f32 %v932, %v941
        %v958 = vmul.f32 %v924, %v942
        %v959 = vmul.f32 %v933, %v943
        %v960 = vmul.f32 %v925, %v944
        %v961 = vmul.f32 %v934, %v945
        %v962 = vmul.f32 %v926, %v946
        %v963 = vmul.f32 %v935, %v947
        %v964 = vmul.f32 %v927, %v948
        %v965 = vmul.f32 %v936, %v949
        %v966 = vmul.f32 %v928, %v950
        %v967 = vmul.f32 %v937, %v951
        %v968 = vmul.f32 %v929, %v952
        %v969 = vmul.f32 %v938, %v953
        %v970 = vmul.f32 %v930, %v954
        %v971 = vmul.f32 %v939, %v955
        %v972 = vmul.f32 %v931, %v956
        %v973 = vadd.f32 %v875, %v957
        %v974 = vadd.f32 %v876, %v958
        %v975 = vadd.f32 %v877, %v959
        %v976 = vadd.f32 %v878, %v960
        %v977 = vadd.f32 %v879, %v961
        %v978 = vadd.f32 %v880, %v962
        %v979 = vadd.f32 %v881, %v963
        %v980 = vadd.f32 %v882, %v964
        %v981 = vadd.f32 %v883, %v965
        %v982 = vadd.f32 %v884, %v966
        %v983 = vadd.f32 %v885, %v967
        %v984 = vadd.f32 %v886, %v968
        %v985 = vadd.f32 %v887, %v969
        %v986 = vadd.f32 %v888, %v970
        %v987 = vadd.f32 %v889, %v971
        %v988 = vadd.f32 %v890, %v972
        %989 = vrot.lane.b32.xlu0 %v525, 127
        %v990 = vpop.permute.xlu0 %989
        %991 = vrot.lane.b32.xlu0 %v529, 127
        %v992 = vpop.permute.xlu0 %991
        %993 = vrot.lane.b32.xlu0 %v535, 127
        %v994 = vpop.permute.xlu0 %993
        %995 = vrot.lane.b32.xlu0 %v539, 127
        %v996 = vpop.permute.xlu0 %995
        %997 = vrot.lane.b32.xlu0 %v545, 127
        %v998 = vpop.permute.xlu0 %997
        %999 = vrot.lane.b32.xlu0 %v549, 127
        %v1000 = vpop.permute.xlu0 %999
        %1001 = vrot.lane.b32.xlu0 %v555, 127
        %v1002 = vpop.permute.xlu0 %1001
        %1003 = vrot.lane.b32.xlu0 %v559, 127
        %v1004 = vpop.permute.xlu0 %1003
        %1005 = vrot.lane.b32.xlu0 %v527, 127
        %v1006 = vpop.permute.xlu0 %1005
        %1007 = vrot.lane.b32.xlu0 %v531, 127
        %v1008 = vpop.permute.xlu0 %1007
        %1009 = vrot.lane.b32.xlu0 %v537, 127
        %v1010 = vpop.permute.xlu0 %1009
        %1011 = vrot.lane.b32.xlu0 %v541, 127
        %v1012 = vpop.permute.xlu0 %1011
        %1013 = vrot.lane.b32.xlu0 %v547, 127
        %v1014 = vpop.permute.xlu0 %1013
        %1015 = vrot.lane.b32.xlu0 %v551, 127
        %v1016 = vpop.permute.xlu0 %1015
        %1017 = vrot.lane.b32.xlu0 %v557, 127
        %v1018 = vpop.permute.xlu0 %1017
        %1019 = vrot.lane.b32.xlu0 %v561, 127
        %v1020 = vpop.permute.xlu0 %1019
        %vm1021 = vcmp.lt.s32.totalorder %v629, 127
        %v1022 = vsel %vm1021, %v990, %v1006
        %v1023 = vsel %vm1021, %v992, %v1008
        %v1024 = vsel %vm1021, %v994, %v1010
        %v1025 = vsel %vm1021, %v996, %v1012
        %v1026 = vsel %vm1021, %v998, %v1014
        %v1027 = vsel %vm1021, %v1000, %v1016
        %v1028 = vsel %vm1021, %v1002, %v1018
        %v1029 = vsel %vm1021, %v1004, %v1020
        %v1030 = vsel %vm1021, %v1006, %v990
        %v1031 = vsel %vm1021, %v1008, %v992
        %v1032 = vsel %vm1021, %v1010, %v994
        %v1033 = vsel %vm1021, %v1012, %v996
        %v1034 = vsel %vm1021, %v1014, %v998
        %v1035 = vsel %vm1021, %v1016, %v1000
        %v1036 = vsel %vm1021, %v1018, %v1002
        %v1037 = vsel %vm1021, %v1020, %v1004
        %s1038 = scalar_lea.vmem [#allocation5], 640
        %v1039 = vld [vmem:[%s1038] sm:$0xff]
        %v1040 = vld [vmem:[%s1038 + $0x8] sm:$0xff]
        %v1041 = vld [vmem:[%s1038 + $0x10] sm:$0xff]
        %v1042 = vld [vmem:[%s1038 + $0x18] sm:$0xff]
        %v1043 = vld [vmem:[%s1038 + $0x20] sm:$0xff]
        %v1044 = vld [vmem:[%s1038 + $0x28] sm:$0xff]
        %v1045 = vld [vmem:[%s1038 + $0x30] sm:$0xff]
        %v1046 = vld [vmem:[%s1038 + $0x38] sm:$0xff]
        %v1047 = vld [vmem:[%s1038 + $0x40] sm:$0xff]
        %v1048 = vld [vmem:[%s1038 + $0x48] sm:$0xff]
        %v1049 = vld [vmem:[%s1038 + $0x50] sm:$0xff]
        %v1050 = vld [vmem:[%s1038 + $0x58] sm:$0xff]
        %v1051 = vld [vmem:[%s1038 + $0x60] sm:$0xff]
        %v1052 = vld [vmem:[%s1038 + $0x68] sm:$0xff]
        %v1053 = vld [vmem:[%s1038 + $0x70] sm:$0xff]
        %v1054 = vld [vmem:[%s1038 + $0x78] sm:$0xff]
        %v1055 = vmul.f32 %v1022, %v1039
        %v1056 = vmul.f32 %v1030, %v1040
        %v1057 = vmul.f32 %v1023, %v1041
        %v1058 = vmul.f32 %v1031, %v1042
        %v1059 = vmul.f32 %v1024, %v1043
        %v1060 = vmul.f32 %v1032, %v1044
        %v1061 = vmul.f32 %v1025, %v1045
        %v1062 = vmul.f32 %v1033, %v1046
        %v1063 = vmul.f32 %v1026, %v1047
        %v1064 = vmul.f32 %v1034, %v1048
        %v1065 = vmul.f32 %v1027, %v1049
        %v1066 = vmul.f32 %v1035, %v1050
        %v1067 = vmul.f32 %v1028, %v1051
        %v1068 = vmul.f32 %v1036, %v1052
        %v1069 = vmul.f32 %v1029, %v1053
        %v1070 = vmul.f32 %v1037, %v1054
        %v1071 = vadd.f32 %v973, %v1055
        %v1072 = vadd.f32 %v974, %v1056
        %v1073 = vadd.f32 %v975, %v1057
        %v1074 = vadd.f32 %v976, %v1058
        %v1075 = vadd.f32 %v977, %v1059
        %v1076 = vadd.f32 %v978, %v1060
        %v1077 = vadd.f32 %v979, %v1061
        %v1078 = vadd.f32 %v980, %v1062
        %v1079 = vadd.f32 %v981, %v1063
        %v1080 = vadd.f32 %v982, %v1064
        %v1081 = vadd.f32 %v983, %v1065
        %v1082 = vadd.f32 %v984, %v1066
        %v1083 = vadd.f32 %v985, %v1067
        %v1084 = vadd.f32 %v986, %v1068
        %v1085 = vadd.f32 %v987, %v1069
        %v1086 = vadd.f32 %v988, %v1070
        %1087 = vrot.lane.b32.xlu0 %v525, 113
        %v1088 = vpop.permute.xlu0 %1087
        %1089 = vrot.lane.b32.xlu0 %v529, 113
        %v1090 = vpop.permute.xlu0 %1089
        %1091 = vrot.lane.b32.xlu0 %v535, 113
        %v1092 = vpop.permute.xlu0 %1091
        %1093 = vrot.lane.b32.xlu0 %v539, 113
        %v1094 = vpop.permute.xlu0 %1093
        %1095 = vrot.lane.b32.xlu0 %v545, 113
        %v1096 = vpop.permute.xlu0 %1095
        %1097 = vrot.lane.b32.xlu0 %v549, 113
        %v1098 = vpop.permute.xlu0 %1097
        %1099 = vrot.lane.b32.xlu0 %v555, 113
        %v1100 = vpop.permute.xlu0 %1099
        %1101 = vrot.lane.b32.xlu0 %v559, 113
        %v1102 = vpop.permute.xlu0 %1101
        %1103 = vrot.lane.b32.xlu0 %v527, 113
        %v1104 = vpop.permute.xlu0 %1103
        %1105 = vrot.lane.b32.xlu0 %v531, 113
        %v1106 = vpop.permute.xlu0 %1105
        %1107 = vrot.lane.b32.xlu0 %v537, 113
        %v1108 = vpop.permute.xlu0 %1107
        %1109 = vrot.lane.b32.xlu0 %v541, 113
        %v1110 = vpop.permute.xlu0 %1109
        %1111 = vrot.lane.b32.xlu0 %v547, 113
        %v1112 = vpop.permute.xlu0 %1111
        %1113 = vrot.lane.b32.xlu0 %v551, 113
        %v1114 = vpop.permute.xlu0 %1113
        %1115 = vrot.lane.b32.xlu0 %v557, 113
        %v1116 = vpop.permute.xlu0 %1115
        %1117 = vrot.lane.b32.xlu0 %v561, 113
        %v1118 = vpop.permute.xlu0 %1117
        %vm1119 = vcmp.lt.s32.totalorder %v629, 113
        %v1120 = vsel %vm1119, %v1088, %v1104
        %v1121 = vsel %vm1119, %v1090, %v1106
        %v1122 = vsel %vm1119, %v1092, %v1108
        %v1123 = vsel %vm1119, %v1094, %v1110
        %v1124 = vsel %vm1119, %v1096, %v1112
        %v1125 = vsel %vm1119, %v1098, %v1114
        %v1126 = vsel %vm1119, %v1100, %v1116
        %v1127 = vsel %vm1119, %v1102, %v1118
        %v1128 = vsel %vm1119, %v1104, %v1088
        %v1129 = vsel %vm1119, %v1106, %v1090
        %v1130 = vsel %vm1119, %v1108, %v1092
        %v1131 = vsel %vm1119, %v1110, %v1094
        %v1132 = vsel %vm1119, %v1112, %v1096
        %v1133 = vsel %vm1119, %v1114, %v1098
        %v1134 = vsel %vm1119, %v1116, %v1100
        %v1135 = vsel %vm1119, %v1118, %v1102
        %s1136 = scalar_lea.vmem [#allocation5], 768
        %v1137 = vld [vmem:[%s1136] sm:$0xff]
        %v1138 = vld [vmem:[%s1136 + $0x8] sm:$0xff]
        %v1139 = vld [vmem:[%s1136 + $0x10] sm:$0xff]
        %v1140 = vld [vmem:[%s1136 + $0x18] sm:$0xff]
        %v1141 = vld [vmem:[%s1136 + $0x20] sm:$0xff]
        %v1142 = vld [vmem:[%s1136 + $0x28] sm:$0xff]
        %v1143 = vld [vmem:[%s1136 + $0x30] sm:$0xff]
        %v1144 = vld [vmem:[%s1136 + $0x38] sm:$0xff]
        %v1145 = vld [vmem:[%s1136 + $0x40] sm:$0xff]
        %v1146 = vld [vmem:[%s1136 + $0x48] sm:$0xff]
        %v1147 = vld [vmem:[%s1136 + $0x50] sm:$0xff]
        %v1148 = vld [vmem:[%s1136 + $0x58] sm:$0xff]
        %v1149 = vld [vmem:[%s1136 + $0x60] sm:$0xff]
        %v1150 = vld [vmem:[%s1136 + $0x68] sm:$0xff]
        %v1151 = vld [vmem:[%s1136 + $0x70] sm:$0xff]
        %v1152 = vld [vmem:[%s1136 + $0x78] sm:$0xff]
        %v1153 = vmul.f32 %v1120, %v1137
        %v1154 = vmul.f32 %v1128, %v1138
        %v1155 = vmul.f32 %v1121, %v1139
        %v1156 = vmul.f32 %v1129, %v1140
        %v1157 = vmul.f32 %v1122, %v1141
        %v1158 = vmul.f32 %v1130, %v1142
        %v1159 = vmul.f32 %v1123, %v1143
        %v1160 = vmul.f32 %v1131, %v1144
        %v1161 = vmul.f32 %v1124, %v1145
        %v1162 = vmul.f32 %v1132, %v1146
        %v1163 = vmul.f32 %v1125, %v1147
        %v1164 = vmul.f32 %v1133, %v1148
        %v1165 = vmul.f32 %v1126, %v1149
        %v1166 = vmul.f32 %v1134, %v1150
        %v1167 = vmul.f32 %v1127, %v1151
        %v1168 = vmul.f32 %v1135, %v1152
        %v1169 = vadd.f32 %v1071, %v1153
        %v1170 = vadd.f32 %v1072, %v1154
        %v1171 = vadd.f32 %v1073, %v1155
        %v1172 = vadd.f32 %v1074, %v1156
        %v1173 = vadd.f32 %v1075, %v1157
        %v1174 = vadd.f32 %v1076, %v1158
        %v1175 = vadd.f32 %v1077, %v1159
        %v1176 = vadd.f32 %v1078, %v1160
        %v1177 = vadd.f32 %v1079, %v1161
        %v1178 = vadd.f32 %v1080, %v1162
        %v1179 = vadd.f32 %v1081, %v1163
        %v1180 = vadd.f32 %v1082, %v1164
        %v1181 = vadd.f32 %v1083, %v1165
        %v1182 = vadd.f32 %v1084, %v1166
        %v1183 = vadd.f32 %v1085, %v1167
        %v1184 = vadd.f32 %v1086, %v1168
        %1185 = vrot.lane.b32.xlu0 %v525, 112
        %v1186 = vpop.permute.xlu0 %1185
        %1187 = vrot.lane.b32.xlu0 %v529, 112
        %v1188 = vpop.permute.xlu0 %1187
        %1189 = vrot.lane.b32.xlu0 %v535, 112
        %v1190 = vpop.permute.xlu0 %1189
        %1191 = vrot.lane.b32.xlu0 %v539, 112
        %v1192 = vpop.permute.xlu0 %1191
        %1193 = vrot.lane.b32.xlu0 %v545, 112
        %v1194 = vpop.permute.xlu0 %1193
        %1195 = vrot.lane.b32.xlu0 %v549, 112
        %v1196 = vpop.permute.xlu0 %1195
        %1197 = vrot.lane.b32.xlu0 %v555, 112
        %v1198 = vpop.permute.xlu0 %1197
        %1199 = vrot.lane.b32.xlu0 %v559, 112
        %v1200 = vpop.permute.xlu0 %1199
        %1201 = vrot.lane.b32.xlu0 %v527, 112
        %v1202 = vpop.permute.xlu0 %1201
        %1203 = vrot.lane.b32.xlu0 %v531, 112
        %v1204 = vpop.permute.xlu0 %1203
        %1205 = vrot.lane.b32.xlu0 %v537, 112
        %v1206 = vpop.permute.xlu0 %1205
        %1207 = vrot.lane.b32.xlu0 %v541, 112
        %v1208 = vpop.permute.xlu0 %1207
        %1209 = vrot.lane.b32.xlu0 %v547, 112
        %v1210 = vpop.permute.xlu0 %1209
        %1211 = vrot.lane.b32.xlu0 %v551, 112
        %v1212 = vpop.permute.xlu0 %1211
        %1213 = vrot.lane.b32.xlu0 %v557, 112
        %v1214 = vpop.permute.xlu0 %1213
        %1215 = vrot.lane.b32.xlu0 %v561, 112
        %v1216 = vpop.permute.xlu0 %1215
        %vm1217 = vcmp.lt.s32.totalorder %v629, 112
        %v1218 = vsel %vm1217, %v1186, %v1202
        %v1219 = vsel %vm1217, %v1188, %v1204
        %v1220 = vsel %vm1217, %v1190, %v1206
        %v1221 = vsel %vm1217, %v1192, %v1208
        %v1222 = vsel %vm1217, %v1194, %v1210
        %v1223 = vsel %vm1217, %v1196, %v1212
        %v1224 = vsel %vm1217, %v1198, %v1214
        %v1225 = vsel %vm1217, %v1200, %v1216
        %v1226 = vsel %vm1217, %v1202, %v1186
        %v1227 = vsel %vm1217, %v1204, %v1188
        %v1228 = vsel %vm1217, %v1206, %v1190
        %v1229 = vsel %vm1217, %v1208, %v1192
        %v1230 = vsel %vm1217, %v1210, %v1194
        %v1231 = vsel %vm1217, %v1212, %v1196
        %v1232 = vsel %vm1217, %v1214, %v1198
        %v1233 = vsel %vm1217, %v1216, %v1200
        %s1234 = scalar_lea.vmem [#allocation5], 896
        %v1235 = vld [vmem:[%s1234] sm:$0xff]
        %v1236 = vld [vmem:[%s1234 + $0x8] sm:$0xff]
        %v1237 = vld [vmem:[%s1234 + $0x10] sm:$0xff]
        %v1238 = vld [vmem:[%s1234 + $0x18] sm:$0xff]
        %v1239 = vld [vmem:[%s1234 + $0x20] sm:$0xff]
        %v1240 = vld [vmem:[%s1234 + $0x28] sm:$0xff]
        %v1241 = vld [vmem:[%s1234 + $0x30] sm:$0xff]
        %v1242 = vld [vmem:[%s1234 + $0x38] sm:$0xff]
        %v1243 = vld [vmem:[%s1234 + $0x40] sm:$0xff]
        %v1244 = vld [vmem:[%s1234 + $0x48] sm:$0xff]
        %v1245 = vld [vmem:[%s1234 + $0x50] sm:$0xff]
        %v1246 = vld [vmem:[%s1234 + $0x58] sm:$0xff]
        %v1247 = vld [vmem:[%s1234 + $0x60] sm:$0xff]
        %v1248 = vld [vmem:[%s1234 + $0x68] sm:$0xff]
        %v1249 = vld [vmem:[%s1234 + $0x70] sm:$0xff]
        %v1250 = vld [vmem:[%s1234 + $0x78] sm:$0xff]
        %v1251 = vmul.f32 %v1218, %v1235
        %v1252 = vmul.f32 %v1226, %v1236
        %v1253 = vmul.f32 %v1219, %v1237
        %v1254 = vmul.f32 %v1227, %v1238
        %v1255 = vmul.f32 %v1220, %v1239
        %v1256 = vmul.f32 %v1228, %v1240
        %v1257 = vmul.f32 %v1221, %v1241
        %v1258 = vmul.f32 %v1229, %v1242
        %v1259 = vmul.f32 %v1222, %v1243
        %v1260 = vmul.f32 %v1230, %v1244
        %v1261 = vmul.f32 %v1223, %v1245
        %v1262 = vmul.f32 %v1231, %v1246
        %v1263 = vmul.f32 %v1224, %v1247
        %v1264 = vmul.f32 %v1232, %v1248
        %v1265 = vmul.f32 %v1225, %v1249
        %v1266 = vmul.f32 %v1233, %v1250
        %v1267 = vadd.f32 %v1169, %v1251
        %v1268 = vadd.f32 %v1170, %v1252
        %v1269 = vadd.f32 %v1171, %v1253
        %v1270 = vadd.f32 %v1172, %v1254
        %v1271 = vadd.f32 %v1173, %v1255
        %v1272 = vadd.f32 %v1174, %v1256
        %v1273 = vadd.f32 %v1175, %v1257
        %v1274 = vadd.f32 %v1176, %v1258
        %v1275 = vadd.f32 %v1177, %v1259
        %v1276 = vadd.f32 %v1178, %v1260
        %v1277 = vadd.f32 %v1179, %v1261
        %v1278 = vadd.f32 %v1180, %v1262
        %v1279 = vadd.f32 %v1181, %v1263
        %v1280 = vadd.f32 %v1182, %v1264
        %v1281 = vadd.f32 %v1183, %v1265
        %v1282 = vadd.f32 %v1184, %v1266
        %1283 = vrot.lane.b32.xlu0 %v525, 111
        %v1284 = vpop.permute.xlu0 %1283
        %1285 = vrot.lane.b32.xlu0 %v529, 111
        %v1286 = vpop.permute.xlu0 %1285
        %1287 = vrot.lane.b32.xlu0 %v535, 111
        %v1288 = vpop.permute.xlu0 %1287
        %1289 = vrot.lane.b32.xlu0 %v539, 111
        %v1290 = vpop.permute.xlu0 %1289
        %1291 = vrot.lane.b32.xlu0 %v545, 111
        %v1292 = vpop.permute.xlu0 %1291
        %1293 = vrot.lane.b32.xlu0 %v549, 111
        %v1294 = vpop.permute.xlu0 %1293
        %1295 = vrot.lane.b32.xlu0 %v555, 111
        %v1296 = vpop.permute.xlu0 %1295
        %1297 = vrot.lane.b32.xlu0 %v559, 111
        %v1298 = vpop.permute.xlu0 %1297
        %1299 = vrot.lane.b32.xlu0 %v527, 111
        %v1300 = vpop.permute.xlu0 %1299
        %1301 = vrot.lane.b32.xlu0 %v531, 111
        %v1302 = vpop.permute.xlu0 %1301
        %1303 = vrot.lane.b32.xlu0 %v537, 111
        %v1304 = vpop.permute.xlu0 %1303
        %1305 = vrot.lane.b32.xlu0 %v541, 111
        %v1306 = vpop.permute.xlu0 %1305
        %1307 = vrot.lane.b32.xlu0 %v547, 111
        %v1308 = vpop.permute.xlu0 %1307
        %1309 = vrot.lane.b32.xlu0 %v551, 111
        %v1310 = vpop.permute.xlu0 %1309
        %1311 = vrot.lane.b32.xlu0 %v557, 111
        %v1312 = vpop.permute.xlu0 %1311
        %1313 = vrot.lane.b32.xlu0 %v561, 111
        %v1314 = vpop.permute.xlu0 %1313
        %vm1315 = vcmp.lt.s32.totalorder %v629, 111
        %v1316 = vsel %vm1315, %v1284, %v1300
        %v1317 = vsel %vm1315, %v1286, %v1302
        %v1318 = vsel %vm1315, %v1288, %v1304
        %v1319 = vsel %vm1315, %v1290, %v1306
        %v1320 = vsel %vm1315, %v1292, %v1308
        %v1321 = vsel %vm1315, %v1294, %v1310
        %v1322 = vsel %vm1315, %v1296, %v1312
        %v1323 = vsel %vm1315, %v1298, %v1314
        %v1324 = vsel %vm1315, %v1300, %v1284
        %v1325 = vsel %vm1315, %v1302, %v1286
        %v1326 = vsel %vm1315, %v1304, %v1288
        %v1327 = vsel %vm1315, %v1306, %v1290
        %v1328 = vsel %vm1315, %v1308, %v1292
        %v1329 = vsel %vm1315, %v1310, %v1294
        %v1330 = vsel %vm1315, %v1312, %v1296
        %v1331 = vsel %vm1315, %v1314, %v1298
        %s1332 = scalar_lea.vmem [#allocation5], 1024
        %v1333 = vld [vmem:[%s1332] sm:$0xff]
        %v1334 = vld [vmem:[%s1332 + $0x8] sm:$0xff]
        %v1335 = vld [vmem:[%s1332 + $0x10] sm:$0xff]
        %v1336 = vld [vmem:[%s1332 + $0x18] sm:$0xff]
        %v1337 = vld [vmem:[%s1332 + $0x20] sm:$0xff]
        %v1338 = vld [vmem:[%s1332 + $0x28] sm:$0xff]
        %v1339 = vld [vmem:[%s1332 + $0x30] sm:$0xff]
        %v1340 = vld [vmem:[%s1332 + $0x38] sm:$0xff]
        %v1341 = vld [vmem:[%s1332 + $0x40] sm:$0xff]
        %v1342 = vld [vmem:[%s1332 + $0x48] sm:$0xff]
        %v1343 = vld [vmem:[%s1332 + $0x50] sm:$0xff]
        %v1344 = vld [vmem:[%s1332 + $0x58] sm:$0xff]
        %v1345 = vld [vmem:[%s1332 + $0x60] sm:$0xff]
        %v1346 = vld [vmem:[%s1332 + $0x68] sm:$0xff]
        %v1347 = vld [vmem:[%s1332 + $0x70] sm:$0xff]
        %v1348 = vld [vmem:[%s1332 + $0x78] sm:$0xff]
        %v1349 = vmul.f32 %v1316, %v1333
        %v1350 = vmul.f32 %v1324, %v1334
        %v1351 = vmul.f32 %v1317, %v1335
        %v1352 = vmul.f32 %v1325, %v1336
        %v1353 = vmul.f32 %v1318, %v1337
        %v1354 = vmul.f32 %v1326, %v1338
        %v1355 = vmul.f32 %v1319, %v1339
        %v1356 = vmul.f32 %v1327, %v1340
        %v1357 = vmul.f32 %v1320, %v1341
        %v1358 = vmul.f32 %v1328, %v1342
        %v1359 = vmul.f32 %v1321, %v1343
        %v1360 = vmul.f32 %v1329, %v1344
        %v1361 = vmul.f32 %v1322, %v1345
        %v1362 = vmul.f32 %v1330, %v1346
        %v1363 = vmul.f32 %v1323, %v1347
        %v1364 = vmul.f32 %v1331, %v1348
        %v1365 = vadd.f32 %v1267, %v1349
        %v1366 = vadd.f32 %v1268, %v1350
        %v1367 = vadd.f32 %v1269, %v1351
        %v1368 = vadd.f32 %v1270, %v1352
        %v1369 = vadd.f32 %v1271, %v1353
        %v1370 = vadd.f32 %v1272, %v1354
        %v1371 = vadd.f32 %v1273, %v1355
        %v1372 = vadd.f32 %v1274, %v1356
        %v1373 = vadd.f32 %v1275, %v1357
        %v1374 = vadd.f32 %v1276, %v1358
        %v1375 = vadd.f32 %v1277, %v1359
        %v1376 = vadd.f32 %v1278, %v1360
        %v1377 = vadd.f32 %v1279, %v1361
        %v1378 = vadd.f32 %v1280, %v1362
        %v1379 = vadd.f32 %v1281, %v1363
        %v1380 = vadd.f32 %v1282, %v1364
        %v1381 = vld [vmem:[#allocation7] sm:$0xff]
        %v1382 = vld [vmem:[#allocation7 + $0x8] sm:$0xff]
        %v1383 = vld [vmem:[#allocation7 + $0x10] sm:$0xff]
        %v1384 = vld [vmem:[#allocation7 + $0x18] sm:$0xff]
        %v1385 = vld [vmem:[#allocation7 + $0x20] sm:$0xff]
        %v1386 = vld [vmem:[#allocation7 + $0x28] sm:$0xff]
        %v1387 = vld [vmem:[#allocation7 + $0x30] sm:$0xff]
        %v1388 = vld [vmem:[#allocation7 + $0x38] sm:$0xff]
        %v1389 = vld [vmem:[#allocation7 + $0x40] sm:$0xff]
        %v1390 = vld [vmem:[#allocation7 + $0x48] sm:$0xff]
        %v1391 = vld [vmem:[#allocation7 + $0x50] sm:$0xff]
        %v1392 = vld [vmem:[#allocation7 + $0x58] sm:$0xff]
        %v1393 = vld [vmem:[#allocation7 + $0x60] sm:$0xff]
        %v1394 = vld [vmem:[#allocation7 + $0x68] sm:$0xff]
        %v1395 = vld [vmem:[#allocation7 + $0x70] sm:$0xff]
        %v1396 = vld [vmem:[#allocation7 + $0x78] sm:$0xff]
        %v1397 = vadd.f32 %v1365, %v1381
        %v1398 = vadd.f32 %v1366, %v1382
        %v1399 = vadd.f32 %v1367, %v1383
        %v1400 = vadd.f32 %v1368, %v1384
        %v1401 = vadd.f32 %v1369, %v1385
        %v1402 = vadd.f32 %v1370, %v1386
        %v1403 = vadd.f32 %v1371, %v1387
        %v1404 = vadd.f32 %v1372, %v1388
        %v1405 = vadd.f32 %v1373, %v1389
        %v1406 = vadd.f32 %v1374, %v1390
        %v1407 = vadd.f32 %v1375, %v1391
        %v1408 = vadd.f32 %v1376, %v1392
        %v1409 = vadd.f32 %v1377, %v1393
        %v1410 = vadd.f32 %v1378, %v1394
        %v1411 = vadd.f32 %v1379, %v1395
        %v1412 = vadd.f32 %v1380, %v1396
        %v1413 = vpack.c.bf16 %v1399, %v1397
        %v1414 = vpack.c.bf16 %v1400, %v1398
        %v1415 = vpack.c.bf16 %v1403, %v1401
        %v1416 = vpack.c.bf16 %v1404, %v1402
        %v1417 = vld [vmem:[#allocation8] sm:$0xff]
        %v1418 = vld [vmem:[#allocation8 + $0x8] sm:$0xff]
        %v1419 = vld [vmem:[#allocation8 + $0x10] sm:$0xff]
        %v1420 = vld [vmem:[#allocation8 + $0x18] sm:$0xff]
        %v1421 = vld [vmem:[#allocation8 + $0x20] sm:$0xff]
        %v1422 = vld [vmem:[#allocation8 + $0x28] sm:$0xff]
        %v1423 = vld [vmem:[#allocation8 + $0x30] sm:$0xff]
        %v1424 = vld [vmem:[#allocation8 + $0x38] sm:$0xff]
        %v1425 = vld [vmem:[#allocation8 + $0x40] sm:$0xff]
        %v1426 = vld [vmem:[#allocation8 + $0x48] sm:$0xff]
        %v1427 = vld [vmem:[#allocation8 + $0x50] sm:$0xff]
        %v1428 = vld [vmem:[#allocation8 + $0x58] sm:$0xff]
        %v1429 = vld [vmem:[#allocation8 + $0x60] sm:$0xff]
        %v1430 = vld [vmem:[#allocation8 + $0x68] sm:$0xff]
        %v1431 = vld [vmem:[#allocation8 + $0x70] sm:$0xff]
        %v1432 = vld [vmem:[#allocation8 + $0x78] sm:$0xff]
        %v1433 = vld [vmem:[#allocation8 + $0x80] sm:$0xff]
        %v1434 = vld [vmem:[#allocation8 + $0x88] sm:$0xff]
        %v1435 = vld [vmem:[#allocation8 + $0x90] sm:$0xff]
        %v1436 = vld [vmem:[#allocation8 + $0x98] sm:$0xff]
        %v1437 = vld [vmem:[#allocation8 + $0xa0] sm:$0xff]
        %v1438 = vld [vmem:[#allocation8 + $0xa8] sm:$0xff]
        %v1439 = vld [vmem:[#allocation8 + $0xb0] sm:$0xff]
        %v1440 = vld [vmem:[#allocation8 + $0xb8] sm:$0xff]
        %v1441 = vld [vmem:[#allocation8 + $0xc0] sm:$0xff]
        %v1442 = vld [vmem:[#allocation8 + $0xc8] sm:$0xff]
        %v1443 = vld [vmem:[#allocation8 + $0xd0] sm:$0xff]
        %v1444 = vld [vmem:[#allocation8 + $0xd8] sm:$0xff]
        %v1445 = vld [vmem:[#allocation8 + $0xe0] sm:$0xff]
        %v1446 = vld [vmem:[#allocation8 + $0xe8] sm:$0xff]
        %v1447 = vld [vmem:[#allocation8 + $0xf0] sm:$0xff]
        %v1448 = vld [vmem:[#allocation8 + $0xf8] sm:$0xff]
        %v1481 = vunpack.c.l.b16 %v1417
        %v1482 = vunpack.c.h.b16 %v1417
        %v1483 = vunpack.c.l.b16 %v1418
        %v1484 = vunpack.c.h.b16 %v1418
        %v1485 = vunpack.c.l.b16 %v1419
        %v1486 = vunpack.c.h.b16 %v1419
        %v1487 = vunpack.c.l.b16 %v1420
        %v1488 = vunpack.c.h.b16 %v1420
        %v1489 = vunpack.c.l.b16 %v1421
        %v1490 = vunpack.c.h.b16 %v1421
        %v1491 = vunpack.c.l.b16 %v1422
        %v1492 = vunpack.c.h.b16 %v1422
        %v1493 = vunpack.c.l.b16 %v1423
        %v1494 = vunpack.c.h.b16 %v1423
        %v1495 = vunpack.c.l.b16 %v1424
        %v1496 = vunpack.c.h.b16 %v1424
        %v1497 = vunpack.c.l.b16 %v1425
        %v1498 = vunpack.c.h.b16 %v1425
        %v1499 = vunpack.c.l.b16 %v1426
        %v1500 = vunpack.c.h.b16 %v1426
        %v1501 = vunpack.c.l.b16 %v1427
        %v1502 = vunpack.c.h.b16 %v1427
        %v1503 = vunpack.c.l.b16 %v1428
        %v1504 = vunpack.c.h.b16 %v1428
        %v1505 = vunpack.c.l.b16 %v1429
        %v1506 = vunpack.c.h.b16 %v1429
        %v1507 = vunpack.c.l.b16 %v1430
        %v1508 = vunpack.c.h.b16 %v1430
        %v1509 = vunpack.c.l.b16 %v1431
        %v1510 = vunpack.c.h.b16 %v1431
        %v1511 = vunpack.c.l.b16 %v1432
        %v1512 = vunpack.c.h.b16 %v1432
        %v1513 = vunpack.c.l.b16 %v1433
        %v1514 = vunpack.c.h.b16 %v1433
        %v1515 = vunpack.c.l.b16 %v1434
        %v1516 = vunpack.c.h.b16 %v1434
        %v1517 = vunpack.c.l.b16 %v1435
        %v1518 = vunpack.c.h.b16 %v1435
        %v1519 = vunpack.c.l.b16 %v1436
        %v1520 = vunpack.c.h.b16 %v1436
        %v1521 = vunpack.c.l.b16 %v1437
        %v1522 = vunpack.c.h.b16 %v1437
        %v1523 = vunpack.c.l.b16 %v1438
        %v1524 = vunpack.c.h.b16 %v1438
        %v1525 = vunpack.c.l.b16 %v1439
        %v1526 = vunpack.c.h.b16 %v1439
        %v1527 = vunpack.c.l.b16 %v1440
        %v1528 = vunpack.c.h.b16 %v1440
        %v1529 = vunpack.c.l.b16 %v1441
        %v1530 = vunpack.c.h.b16 %v1441
        %v1531 = vunpack.c.l.b16 %v1442
        %v1532 = vunpack.c.h.b16 %v1442
        %v1533 = vunpack.c.l.b16 %v1443
        %v1534 = vunpack.c.h.b16 %v1443
        %v1535 = vunpack.c.l.b16 %v1444
        %v1536 = vunpack.c.h.b16 %v1444
        %v1537 = vunpack.c.l.b16 %v1445
        %v1538 = vunpack.c.h.b16 %v1445
        %v1539 = vunpack.c.l.b16 %v1446
        %v1540 = vunpack.c.h.b16 %v1446
        %v1541 = vunpack.c.l.b16 %v1447
        %v1542 = vunpack.c.h.b16 %v1447
        %v1543 = vunpack.c.l.b16 %v1448
        %v1544 = vunpack.c.h.b16 %v1448
        %v1545 = vpack.c.b16 %v1483, %v1481
        %v1546 = vpack.c.b16 %v1484, %v1482
        %v1547 = vpack.c.b16 %v1487, %v1485
        %v1548 = vpack.c.b16 %v1488, %v1486
        %v1549 = vpack.c.b16 %v1491, %v1489
        %v1550 = vpack.c.b16 %v1492, %v1490
        %v1551 = vpack.c.b16 %v1495, %v1493
        %v1552 = vpack.c.b16 %v1496, %v1494
        %v1553 = vpack.c.b16 %v1499, %v1497
        %v1554 = vpack.c.b16 %v1500, %v1498
        %v1555 = vpack.c.b16 %v1503, %v1501
        %v1556 = vpack.c.b16 %v1504, %v1502
        %v1557 = vpack.c.b16 %v1507, %v1505
        %v1558 = vpack.c.b16 %v1508, %v1506
        %v1559 = vpack.c.b16 %v1511, %v1509
        %v1560 = vpack.c.b16 %v1512, %v1510
        %v1561 = vpack.c.b16 %v1515, %v1513
        %v1562 = vpack.c.b16 %v1516, %v1514
        %v1563 = vpack.c.b16 %v1519, %v1517
        %v1564 = vpack.c.b16 %v1520, %v1518
        %v1565 = vpack.c.b16 %v1523, %v1521
        %v1566 = vpack.c.b16 %v1524, %v1522
        %v1567 = vpack.c.b16 %v1527, %v1525
        %v1568 = vpack.c.b16 %v1528, %v1526
        %v1569 = vpack.c.b16 %v1531, %v1529
        %v1570 = vpack.c.b16 %v1532, %v1530
        %v1571 = vpack.c.b16 %v1535, %v1533
        %v1572 = vpack.c.b16 %v1536, %v1534
        %v1573 = vpack.c.b16 %v1539, %v1537
        %v1574 = vpack.c.b16 %v1540, %v1538
        %v1575 = vpack.c.b16 %v1543, %v1541
        %v1576 = vpack.c.b16 %v1544, %v1542
        %1609 = vmatprep.subr.bf16.mxu0 %v1546
        %1610 = vmatpush1.bf16.msra.mxu0 %v1545
        %1611 = vmatprep.subr.bf16.mxu0 %v1548
        %1612 = vmatpush1.bf16.msra.mxu0 %v1547
        %1613 = vmatprep.subr.bf16.mxu0 %v1550
        %1614 = vmatpush1.bf16.msra.mxu0 %v1549
        %1615 = vmatprep.subr.bf16.mxu0 %v1552
        %1616 = vmatpush1.bf16.msra.mxu0 %v1551
        %1617 = vmatprep.subr.bf16.mxu0 %v1554
        %1618 = vmatpush1.bf16.msra.mxu0 %v1553
        %1619 = vmatprep.subr.bf16.mxu0 %v1556
        %1620 = vmatpush1.bf16.msra.mxu0 %v1555
        %1621 = vmatprep.subr.bf16.mxu0 %v1558
        %1622 = vmatpush1.bf16.msra.mxu0 %v1557
        %1623 = vmatprep.subr.bf16.mxu0 %v1560
        %1624 = vmatpush1.bf16.msra.mxu0 %v1559
        %1625 = vmatprep.subr.bf16.mxu0 %v1562
        %1626 = vmatpush1.bf16.msra.mxu0 %v1561
        %1627 = vmatprep.subr.bf16.mxu0 %v1564
        %1628 = vmatpush1.bf16.msra.mxu0 %v1563
        %1629 = vmatprep.subr.bf16.mxu0 %v1566
        %1630 = vmatpush1.bf16.msra.mxu0 %v1565
        %1631 = vmatprep.subr.bf16.mxu0 %v1568
        %1632 = vmatpush1.bf16.msra.mxu0 %v1567
        %1633 = vmatprep.subr.bf16.mxu0 %v1570
        %1634 = vmatpush1.bf16.msra.mxu0 %v1569
        %1635 = vmatprep.subr.bf16.mxu0 %v1572
        %1636 = vmatpush1.bf16.msra.mxu0 %v1571
        %1637 = vmatprep.subr.bf16.mxu0 %v1574
        %1638 = vmatpush1.bf16.msra.mxu0 %v1573
        %1639 = vmatprep.subr.bf16.mxu0 %v1576
        %1640 = vmatpush1.bf16.msra.mxu0 %v1575
        %1641 = vmatprep.mubr.bf16.mxu0 %v1414
        %1642 = vmatmul.mubr.bf16.gmra.mrb[0].mxu0 %v1413
        %v1643 = vpop.f32.mrb[0].mxu0
        %v1644 = vadd.f32 0.0, %v1643
        %v1645 = vpop.f32.mrb[0].mxu0
        %v1646 = vadd.f32 0.0, %v1645
        %v1647 = vpop.f32.mrb[0].mxu0
        %v1648 = vadd.f32 0.0, %v1647
        %v1649 = vpop.f32.mrb[0].mxu0
        %v1650 = vadd.f32 0.0, %v1649
        %1651 = vmatprep.mubr.bf16.mxu0 %v1416
        %1652 = vmatmul.mubr.bf16.gmra.mrb[0].mxu0 %v1415
        %v1653 = vpop.f32.mrb[0].mxu0
        %v1654 = vadd.f32 0.0, %v1653
        %v1655 = vpop.f32.mrb[0].mxu0
        %v1656 = vadd.f32 0.0, %v1655
        %v1657 = vpop.f32.mrb[0].mxu0
        %v1658 = vadd.f32 0.0, %v1657
        %v1659 = vpop.f32.mrb[0].mxu0
        %v1660 = vadd.f32 0.0, %v1659
        %1661 = vdwg.mxu0
        %v1662 = vadd.f32 %v1644, %v1646
        %1663 = vadd.xlane.f32.xlu0 %v1662
        %v1664 = vpop.xlane.xlu0 %1663
        %v1665 = vadd.f32 %v1648, %v1650
        %1666 = vadd.xlane.f32.xlu0 %v1665
        %v1667 = vpop.xlane.xlu0 %1666
        %v1668 = vadd.f32 %v1654, %v1656
        %1669 = vadd.xlane.f32.xlu0 %v1668
        %v1670 = vpop.xlane.xlu0 %1669
        %v1671 = vadd.f32 %v1658, %v1660
        %1672 = vadd.xlane.f32.xlu0 %v1671
        %v1673 = vpop.xlane.xlu0 %1672
        %v1674 = vmul.f32 %v1664, 0.00390625
        %v1675 = vmul.f32 %v1667, 0.00390625
        %v1676 = vmul.f32 %v1670, 0.00390625
        %v1677 = vmul.f32 %v1673, 0.00390625
        %v1678 = vld [vmem:[%s6] sm:$0xff]
        %v1680 = vsel %vm477, %v1678, 0
        %1682 = vmatprep.subr.mxu0 0.0
        %1683 = vmatpush1.msra.mxu0 %v1674
        %1684 = vmatprep.subr.mxu0 0.0
        %1685 = vmatpush1.msra.mxu0 %v1675
        %1686 = vmatprep.subr.mxu0 0.0
        %1687 = vmatpush1.msra.mxu0 %v1676
        %1688 = vmatprep.subr.mxu0 0.0
        %1689 = vmatpush1.msra.mxu0 %v1677
        %1690 = vmatprep.subr.mxu0 0.0
        %1691 = vmatpush1.msra.mxu0 0.0
        %1692 = vmatprep.subr.mxu0 0.0
        %1693 = vmatpush1.msra.mxu0 0.0
        %1694 = vmatprep.subr.mxu0 0.0
        %1695 = vmatpush1.msra.mxu0 0.0
        %1696 = vmatprep.subr.mxu0 0.0
        %1697 = vmatpush1.msra.mxu0 0.0
        %1698 = vmatprep.subr.mxu0 0.0
        %1699 = vmatpush1.msra.mxu0 0.0
        %1700 = vmatprep.subr.mxu0 0.0
        %1701 = vmatpush1.msra.mxu0 0.0
        %1702 = vmatprep.subr.mxu0 0.0
        %1703 = vmatpush1.msra.mxu0 0.0
        %1704 = vmatprep.subr.mxu0 0.0
        %1705 = vmatpush1.msra.mxu0 0.0
        %1706 = vmatprep.subr.mxu0 0.0
        %1707 = vmatpush1.msra.mxu0 0.0
        %1708 = vmatprep.subr.mxu0 0.0
        %1709 = vmatpush1.msra.mxu0 0.0
        %1710 = vmatprep.subr.mxu0 0.0
        %1711 = vmatpush1.msra.mxu0 0.0
        %1712 = vmatprep.subr.mxu0 0.0
        %1713 = vmatpush1.msra.mxu0 0.0
        %1714 = vmatprep.subr.mxu0 0.0
        %1715 = vmatpush1.msra.mxu0 0.0
        %1716 = vmatprep.subr.mxu0 0.0
        %1717 = vmatpush1.msra.mxu0 0.0
        %1718 = vmatprep.subr.mxu0 0.0
        %1719 = vmatpush1.msra.mxu0 0.0
        %1720 = vmatprep.subr.mxu0 0.0
        %1721 = vmatpush1.msra.mxu0 0.0
        %1722 = vmatprep.subr.mxu0 0.0
        %1723 = vmatpush1.msra.mxu0 0.0
        %1724 = vmatprep.subr.mxu0 0.0
        %1725 = vmatpush1.msra.mxu0 0.0
        %1726 = vmatprep.subr.mxu0 0.0
        %1727 = vmatpush1.msra.mxu0 0.0
        %1728 = vmatprep.subr.mxu0 0.0
        %1729 = vmatpush1.msra.mxu0 0.0
        %1730 = vmatprep.subr.mxu0 0.0
        %1731 = vmatpush1.msra.mxu0 0.0
        %1732 = vmatprep.subr.mxu0 0.0
        %1733 = vmatpush1.msra.mxu0 0.0
        %1734 = vmatprep.subr.mxu0 0.0
        %1735 = vmatpush1.msra.mxu0 0.0
        %1736 = vmatprep.subr.mxu0 0.0
        %1737 = vmatpush1.msra.mxu0 0.0
        %1738 = vmatprep.subr.mxu0 0.0
        %1739 = vmatpush1.msra.mxu0 0.0
        %1740 = vmatprep.subr.mxu0 0.0
        %1741 = vmatpush1.msra.mxu0 0.0
        %1742 = vmatprep.subr.mxu0 0.0
        %1743 = vmatpush1.msra.mxu0 0.0
        %1744 = vmatprep.subr.mxu0 0.0
        %1745 = vmatpush1.msra.mxu0 0.0
        %1746 = vmatprep.mubr.f32.mxu0 0.0
        %1747 = vmatmul.mubr.f32.gmra.mrb[0].mxu0 %v1680
        %v1748 = vpop.f32.mrb[0].mxu0
        %v1749 = vadd.f32 0.0, %v1748
        %v1750 = vpop.f32.mrb[0].mxu0
        %1751 = vdwg.mxu0
        %v1752 = vmax.f32 %v1749, 0.0
        %v1753 = vld [vmem:[%s7] sm:$0xff]
        %v1754 = vld [vmem:[%s7 + $0x8] sm:$0xff]
        %v1755 = vld [vmem:[%s7 + $0x10] sm:$0xff]
        %v1756 = vld [vmem:[%s7 + $0x18] sm:$0xff]
        %vm1757 = vcmask 64512
        %v1759 = vsel %vm1757, %v1753, 0
        %v1762 = vsel %vm1757, %v1754, 0
        %v1765 = vsel %vm1757, %v1755, 0
        %v1768 = vsel %vm1757, %v1756, 0
        %1770 = vmatprep.subr.mxu0 0.0
        %1771 = vmatpush1.msra.mxu0 %v1752
        %1772 = vmatprep.subr.mxu0 0.0
        %1773 = vmatpush1.msra.mxu0 0.0
        %1774 = vmatprep.subr.mxu0 0.0
        %1775 = vmatpush1.msra.mxu0 0.0
        %1776 = vmatprep.subr.mxu0 0.0
        %1777 = vmatpush1.msra.mxu0 0.0
        %1778 = vmatprep.subr.mxu0 0.0
        %1779 = vmatpush1.msra.mxu0 0.0
        %1780 = vmatprep.subr.mxu0 0.0
        %1781 = vmatpush1.msra.mxu0 0.0
        %1782 = vmatprep.subr.mxu0 0.0
        %1783 = vmatpush1.msra.mxu0 0.0
        %1784 = vmatprep.subr.mxu0 0.0
        %1785 = vmatpush1.msra.mxu0 0.0
        %1786 = vmatprep.subr.mxu0 0.0
        %1787 = vmatpush1.msra.mxu0 0.0
        %1788 = vmatprep.subr.mxu0 0.0
        %1789 = vmatpush1.msra.mxu0 0.0
        %1790 = vmatprep.subr.mxu0 0.0
        %1791 = vmatpush1.msra.mxu0 0.0
        %1792 = vmatprep.subr.mxu0 0.0
        %1793 = vmatpush1.msra.mxu0 0.0
        %1794 = vmatprep.subr.mxu0 0.0
        %1795 = vmatpush1.msra.mxu0 0.0
        %1796 = vmatprep.subr.mxu0 0.0
        %1797 = vmatpush1.msra.mxu0 0.0
        %1798 = vmatprep.subr.mxu0 0.0
        %1799 = vmatpush1.msra.mxu0 0.0
        %1800 = vmatprep.subr.mxu0 0.0
        %1801 = vmatpush1.msra.mxu0 0.0
        %1802 = vmatprep.subr.mxu0 0.0
        %1803 = vmatpush1.msra.mxu0 0.0
        %1804 = vmatprep.subr.mxu0 0.0
        %1805 = vmatpush1.msra.mxu0 0.0
        %1806 = vmatprep.subr.mxu0 0.0
        %1807 = vmatpush1.msra.mxu0 0.0
        %1808 = vmatprep.subr.mxu0 0.0
        %1809 = vmatpush1.msra.mxu0 0.0
        %1810 = vmatprep.subr.mxu0 0.0
        %1811 = vmatpush1.msra.mxu0 0.0
        %1812 = vmatprep.subr.mxu0 0.0
        %1813 = vmatpush1.msra.mxu0 0.0
        %1814 = vmatprep.subr.mxu0 0.0
        %1815 = vmatpush1.msra.mxu0 0.0
        %1816 = vmatprep.subr.mxu0 0.0
        %1817 = vmatpush1.msra.mxu0 0.0
        %1818 = vmatprep.subr.mxu0 0.0
        %1819 = vmatpush1.msra.mxu0 0.0
        %1820 = vmatprep.subr.mxu0 0.0
        %1821 = vmatpush1.msra.mxu0 0.0
        %1822 = vmatprep.subr.mxu0 0.0
        %1823 = vmatpush1.msra.mxu0 0.0
        %1824 = vmatprep.subr.mxu0 0.0
        %1825 = vmatpush1.msra.mxu0 0.0
        %1826 = vmatprep.subr.mxu0 0.0
        %1827 = vmatpush1.msra.mxu0 0.0
        %1828 = vmatprep.subr.mxu0 0.0
        %1829 = vmatpush1.msra.mxu0 0.0
        %1830 = vmatprep.subr.mxu0 0.0
        %1831 = vmatpush1.msra.mxu0 0.0
        %1832 = vmatprep.subr.mxu0 0.0
        %1833 = vmatpush1.msra.mxu0 0.0
        %1834 = vmatprep.mubr.f32.mxu0 0.0
        %1835 = vmatmul.mubr.f32.gmra.mrb[0].mxu0 %v1759
        %v1836 = vpop.f32.mrb[0].mxu0
        %v1837 = vadd.f32 0.0, %v1836
        %v1838 = vpop.f32.mrb[0].mxu0
        %1839 = vmatprep.mubr.f32.mxu0 0.0
        %1840 = vmatmul.mubr.f32.gmra.mrb[0].mxu0 %v1762
        %v1841 = vpop.f32.mrb[0].mxu0
        %v1842 = vadd.f32 0.0, %v1841
        %v1843 = vpop.f32.mrb[0].mxu0
        %1844 = vmatprep.mubr.f32.mxu0 0.0
        %1845 = vmatmul.mubr.f32.gmra.mrb[0].mxu0 %v1765
        %v1846 = vpop.f32.mrb[0].mxu0
        %v1847 = vadd.f32 0.0, %v1846
        %v1848 = vpop.f32.mrb[0].mxu0
        %1849 = vmatprep.mubr.f32.mxu0 0.0
        %1850 = vmatmul.mubr.f32.gmra.mrb[0].mxu0 %v1768
        %v1851 = vpop.f32.mrb[0].mxu0
        %v1852 = vadd.f32 0.0, %v1851
        %v1853 = vpop.f32.mrb[0].mxu0
        %1854 = vdwg.mxu0
        %v1855 = vxor.u32 %v1837, 2147483648
        %v1856 = vxor.u32 %v1842, 2147483648
        %v1857 = vxor.u32 %v1847, 2147483648
        %v1858 = vxor.u32 %v1852, 2147483648
        %v1859 = vmul.f32 %v1855, 1.442695
        %v1860 = vpow.pop %v1859
        %v1861 = vmul.f32 %v1856, 1.442695
        %v1862 = vpow.pop %v1861
        %v1863 = vmul.f32 %v1857, 1.442695
        %v1864 = vpow.pop %v1863
        %v1865 = vmul.f32 %v1858, 1.442695
        %v1866 = vpow.pop %v1865
        %v1867 = vadd.f32 %v1860, 1.0
        %v1868 = vadd.f32 %v1862, 1.0
        %v1869 = vadd.f32 %v1864, 1.0
        %v1870 = vadd.f32 %v1866, 1.0
        %v1871 = vrcp.pop %v1867
        %v1872 = vmul.f32 1.0, %v1871
        %v1873 = vrcp.pop %v1868
        %v1874 = vmul.f32 1.0, %v1873
        %v1875 = vrcp.pop %v1869
        %v1876 = vmul.f32 1.0, %v1875
        %v1877 = vrcp.pop %v1870
        %v1878 = vmul.f32 1.0, %v1877
        %1880 = vset.pattern.permute.xlu0 0
        %1881 = vperm.xlu0 %1880, %v1872
        %v1882 = vpop.permute.xlu0 %1881
        %1885 = vset.pattern.permute.xlu0 0
        %1886 = vperm.xlu0 %1885, %v1874
        %v1887 = vpop.permute.xlu0 %1886
        %1890 = vset.pattern.permute.xlu0 0
        %1891 = vperm.xlu0 %1890, %v1876
        %v1892 = vpop.permute.xlu0 %1891
        %1895 = vset.pattern.permute.xlu0 0
        %1896 = vperm.xlu0 %1895, %v1878
        %v1897 = vpop.permute.xlu0 %1896
        %v1899 = vmul.f32 %v1644, %v1882
        %v1900 = vmul.f32 %v1646, %v1882
        %v1901 = vmul.f32 %v1648, %v1887
        %v1902 = vmul.f32 %v1650, %v1887
        %v1903 = vmul.f32 %v1654, %v1892
        %v1904 = vmul.f32 %v1656, %v1892
        %v1905 = vmul.f32 %v1658, %v1897
        %v1906 = vmul.f32 %v1660, %v1897
        %v1907 = vpack.c.bf16 %v1901, %v1899
        %v1908 = vpack.c.bf16 %v1902, %v1900
        %v1909 = vpack.c.bf16 %v1905, %v1903
        %v1910 = vpack.c.bf16 %v1906, %v1904
        %v1911 = vld [vmem:[#allocation10] sm:$0xff]
        %v1912 = vld [vmem:[#allocation10 + $0x8] sm:$0xff]
        %v1913 = vld [vmem:[#allocation10 + $0x10] sm:$0xff]
        %v1914 = vld [vmem:[#allocation10 + $0x18] sm:$0xff]
        %v1915 = vld [vmem:[#allocation10 + $0x20] sm:$0xff]
        %v1916 = vld [vmem:[#allocation10 + $0x28] sm:$0xff]
        %v1917 = vld [vmem:[#allocation10 + $0x30] sm:$0xff]
        %v1918 = vld [vmem:[#allocation10 + $0x38] sm:$0xff]
        %v1919 = vld [vmem:[#allocation10 + $0x40] sm:$0xff]
        %v1920 = vld [vmem:[#allocation10 + $0x48] sm:$0xff]
        %v1921 = vld [vmem:[#allocation10 + $0x50] sm:$0xff]
        %v1922 = vld [vmem:[#allocation10 + $0x58] sm:$0xff]
        %v1923 = vld [vmem:[#allocation10 + $0x60] sm:$0xff]
        %v1924 = vld [vmem:[#allocation10 + $0x68] sm:$0xff]
        %v1925 = vld [vmem:[#allocation10 + $0x70] sm:$0xff]
        %v1926 = vld [vmem:[#allocation10 + $0x78] sm:$0xff]
        %v1927 = vld [vmem:[#allocation10 + $0x80] sm:$0xff]
        %v1928 = vld [vmem:[#allocation10 + $0x88] sm:$0xff]
        %v1929 = vld [vmem:[#allocation10 + $0x90] sm:$0xff]
        %v1930 = vld [vmem:[#allocation10 + $0x98] sm:$0xff]
        %v1931 = vld [vmem:[#allocation10 + $0xa0] sm:$0xff]
        %v1932 = vld [vmem:[#allocation10 + $0xa8] sm:$0xff]
        %v1933 = vld [vmem:[#allocation10 + $0xb0] sm:$0xff]
        %v1934 = vld [vmem:[#allocation10 + $0xb8] sm:$0xff]
        %v1935 = vld [vmem:[#allocation10 + $0xc0] sm:$0xff]
        %v1936 = vld [vmem:[#allocation10 + $0xc8] sm:$0xff]
        %v1937 = vld [vmem:[#allocation10 + $0xd0] sm:$0xff]
        %v1938 = vld [vmem:[#allocation10 + $0xd8] sm:$0xff]
        %v1939 = vld [vmem:[#allocation10 + $0xe0] sm:$0xff]
        %v1940 = vld [vmem:[#allocation10 + $0xe8] sm:$0xff]
        %v1941 = vld [vmem:[#allocation10 + $0xf0] sm:$0xff]
        %v1942 = vld [vmem:[#allocation10 + $0xf8] sm:$0xff]
        %v1975 = vunpack.c.l.b16 %v1911
        %v1976 = vunpack.c.h.b16 %v1911
        %v1977 = vunpack.c.l.b16 %v1912
        %v1978 = vunpack.c.h.b16 %v1912
        %v1979 = vunpack.c.l.b16 %v1913
        %v1980 = vunpack.c.h.b16 %v1913
        %v1981 = vunpack.c.l.b16 %v1914
        %v1982 = vunpack.c.h.b16 %v1914
        %v1983 = vunpack.c.l.b16 %v1915
        %v1984 = vunpack.c.h.b16 %v1915
        %v1985 = vunpack.c.l.b16 %v1916
        %v1986 = vunpack.c.h.b16 %v1916
        %v1987 = vunpack.c.l.b16 %v1917
        %v1988 = vunpack.c.h.b16 %v1917
        %v1989 = vunpack.c.l.b16 %v1918
        %v1990 = vunpack.c.h.b16 %v1918
        %v1991 = vunpack.c.l.b16 %v1919
        %v1992 = vunpack.c.h.b16 %v1919
        %v1993 = vunpack.c.l.b16 %v1920
        %v1994 = vunpack.c.h.b16 %v1920
        %v1995 = vunpack.c.l.b16 %v1921
        %v1996 = vunpack.c.h.b16 %v1921
        %v1997 = vunpack.c.l.b16 %v1922
        %v1998 = vunpack.c.h.b16 %v1922
        %v1999 = vunpack.c.l.b16 %v1923
        %v2000 = vunpack.c.h.b16 %v1923
        %v2001 = vunpack.c.l.b16 %v1924
        %v2002 = vunpack.c.h.b16 %v1924
        %v2003 = vunpack.c.l.b16 %v1925
        %v2004 = vunpack.c.h.b16 %v1925
        %v2005 = vunpack.c.l.b16 %v1926
        %v2006 = vunpack.c.h.b16 %v1926
        %v2007 = vunpack.c.l.b16 %v1927
        %v2008 = vunpack.c.h.b16 %v1927
        %v2009 = vunpack.c.l.b16 %v1928
        %v2010 = vunpack.c.h.b16 %v1928
        %v2011 = vunpack.c.l.b16 %v1929
        %v2012 = vunpack.c.h.b16 %v1929
        %v2013 = vunpack.c.l.b16 %v1930
        %v2014 = vunpack.c.h.b16 %v1930
        %v2015 = vunpack.c.l.b16 %v1931
        %v2016 = vunpack.c.h.b16 %v1931
        %v2017 = vunpack.c.l.b16 %v1932
        %v2018 = vunpack.c.h.b16 %v1932
        %v2019 = vunpack.c.l.b16 %v1933
        %v2020 = vunpack.c.h.b16 %v1933
        %v2021 = vunpack.c.l.b16 %v1934
        %v2022 = vunpack.c.h.b16 %v1934
        %v2023 = vunpack.c.l.b16 %v1935
        %v2024 = vunpack.c.h.b16 %v1935
        %v2025 = vunpack.c.l.b16 %v1936
        %v2026 = vunpack.c.h.b16 %v1936
        %v2027 = vunpack.c.l.b16 %v1937
        %v2028 = vunpack.c.h.b16 %v1937
        %v2029 = vunpack.c.l.b16 %v1938
        %v2030 = vunpack.c.h.b16 %v1938
        %v2031 = vunpack.c.l.b16 %v1939
        %v2032 = vunpack.c.h.b16 %v1939
        %v2033 = vunpack.c.l.b16 %v1940
        %v2034 = vunpack.c.h.b16 %v1940
        %v2035 = vunpack.c.l.b16 %v1941
        %v2036 = vunpack.c.h.b16 %v1941
        %v2037 = vunpack.c.l.b16 %v1942
        %v2038 = vunpack.c.h.b16 %v1942
        %v2039 = vpack.c.b16 %v1977, %v1975
        %v2040 = vpack.c.b16 %v1978, %v1976
        %v2041 = vpack.c.b16 %v1981, %v1979
        %v2042 = vpack.c.b16 %v1982, %v1980
        %v2043 = vpack.c.b16 %v1985, %v1983
        %v2044 = vpack.c.b16 %v1986, %v1984
        %v2045 = vpack.c.b16 %v1989, %v1987
        %v2046 = vpack.c.b16 %v1990, %v1988
        %v2047 = vpack.c.b16 %v1993, %v1991
        %v2048 = vpack.c.b16 %v1994, %v1992
        %v2049 = vpack.c.b16 %v1997, %v1995
        %v2050 = vpack.c.b16 %v1998, %v1996
        %v2051 = vpack.c.b16 %v2001, %v1999
        %v2052 = vpack.c.b16 %v2002, %v2000
        %v2053 = vpack.c.b16 %v2005, %v2003
        %v2054 = vpack.c.b16 %v2006, %v2004
        %v2055 = vpack.c.b16 %v2009, %v2007
        %v2056 = vpack.c.b16 %v2010, %v2008
        %v2057 = vpack.c.b16 %v2013, %v2011
        %v2058 = vpack.c.b16 %v2014, %v2012
        %v2059 = vpack.c.b16 %v2017, %v2015
        %v2060 = vpack.c.b16 %v2018, %v2016
        %v2061 = vpack.c.b16 %v2021, %v2019
        %v2062 = vpack.c.b16 %v2022, %v2020
        %v2063 = vpack.c.b16 %v2025, %v2023
        %v2064 = vpack.c.b16 %v2026, %v2024
        %v2065 = vpack.c.b16 %v2029, %v2027
        %v2066 = vpack.c.b16 %v2030, %v2028
        %v2067 = vpack.c.b16 %v2033, %v2031
        %v2068 = vpack.c.b16 %v2034, %v2032
        %v2069 = vpack.c.b16 %v2037, %v2035
        %v2070 = vpack.c.b16 %v2038, %v2036
        %2103 = vmatprep.subr.bf16.mxu0 %v2040
        %2104 = vmatpush1.bf16.msra.mxu0 %v2039
        %2105 = vmatprep.subr.bf16.mxu0 %v2042
        %2106 = vmatpush1.bf16.msra.mxu0 %v2041
        %2107 = vmatprep.subr.bf16.mxu0 %v2044
        %2108 = vmatpush1.bf16.msra.mxu0 %v2043
        %2109 = vmatprep.subr.bf16.mxu0 %v2046
        %2110 = vmatpush1.bf16.msra.mxu0 %v2045
        %2111 = vmatprep.subr.bf16.mxu0 %v2048
        %2112 = vmatpush1.bf16.msra.mxu0 %v2047
        %2113 = vmatprep.subr.bf16.mxu0 %v2050
        %2114 = vmatpush1.bf16.msra.mxu0 %v2049
        %2115 = vmatprep.subr.bf16.mxu0 %v2052
        %2116 = vmatpush1.bf16.msra.mxu0 %v2051
        %2117 = vmatprep.subr.bf16.mxu0 %v2054
        %2118 = vmatpush1.bf16.msra.mxu0 %v2053
        %2119 = vmatprep.subr.bf16.mxu0 %v2056
        %2120 = vmatpush1.bf16.msra.mxu0 %v2055
        %2121 = vmatprep.subr.bf16.mxu0 %v2058
        %2122 = vmatpush1.bf16.msra.mxu0 %v2057
        %2123 = vmatprep.subr.bf16.mxu0 %v2060
        %2124 = vmatpush1.bf16.msra.mxu0 %v2059
        %2125 = vmatprep.subr.bf16.mxu0 %v2062
        %2126 = vmatpush1.bf16.msra.mxu0 %v2061
        %2127 = vmatprep.subr.bf16.mxu0 %v2064
        %2128 = vmatpush1.bf16.msra.mxu0 %v2063
        %2129 = vmatprep.subr.bf16.mxu0 %v2066
        %2130 = vmatpush1.bf16.msra.mxu0 %v2065
        %2131 = vmatprep.subr.bf16.mxu0 %v2068
        %2132 = vmatpush1.bf16.msra.mxu0 %v2067
        %2133 = vmatprep.subr.bf16.mxu0 %v2070
        %2134 = vmatpush1.bf16.msra.mxu0 %v2069
        %2135 = vmatprep.mubr.bf16.mxu0 %v1908
        %2136 = vmatmul.mubr.bf16.gmra.mrb[0].mxu0 %v1907
        %v2137 = vpop.f32.mrb[0].mxu0
        %v2138 = vadd.f32 0.0, %v2137
        %v2139 = vpop.f32.mrb[0].mxu0
        %v2140 = vadd.f32 0.0, %v2139
        %v2141 = vpop.f32.mrb[0].mxu0
        %v2142 = vadd.f32 0.0, %v2141
        %v2143 = vpop.f32.mrb[0].mxu0
        %v2144 = vadd.f32 0.0, %v2143
        %2145 = vmatprep.mubr.bf16.mxu0 %v1910
        %2146 = vmatmul.mubr.bf16.gmra.mrb[0].mxu0 %v1909
        %v2147 = vpop.f32.mrb[0].mxu0
        %v2148 = vadd.f32 0.0, %v2147
        %v2149 = vpop.f32.mrb[0].mxu0
        %v2150 = vadd.f32 0.0, %v2149
        %v2151 = vpop.f32.mrb[0].mxu0
        %v2152 = vadd.f32 0.0, %v2151
        %v2153 = vpop.f32.mrb[0].mxu0
        %v2154 = vadd.f32 0.0, %v2153
        %2155 = vdwg.mxu0
        %v2156 = vand.u32 2147483647, %v2138
        %v2157 = vand.u32 2147483647, %v2140
        %v2158 = vand.u32 2147483647, %v2142
        %v2159 = vand.u32 2147483647, %v2144
        %v2160 = vand.u32 2147483647, %v2148
        %v2161 = vand.u32 2147483647, %v2150
        %v2162 = vand.u32 2147483647, %v2152
        %v2163 = vand.u32 2147483647, %v2154
        %v2164 = vmul.f32 %v2156, 0.70710677
        %v2165 = vmul.f32 %v2157, 0.70710677
        %v2166 = vmul.f32 %v2158, 0.70710677
        %v2167 = vmul.f32 %v2159, 0.70710677
        %v2168 = vmul.f32 %v2160, 0.70710677
        %v2169 = vmul.f32 %v2161, 0.70710677
        %v2170 = vmul.f32 %v2162, 0.70710677
        %v2171 = vmul.f32 %v2163, 0.70710677
        %v2172 = vmul.f32 %v2164, 0.3275911
        %v2173 = vmul.f32 %v2165, 0.3275911
        %v2174 = vmul.f32 %v2166, 0.3275911
        %v2175 = vmul.f32 %v2167, 0.3275911
        %v2176 = vmul.f32 %v2168, 0.3275911
        %v2177 = vmul.f32 %v2169, 0.3275911
        %v2178 = vmul.f32 %v2170, 0.3275911
        %v2179 = vmul.f32 %v2171, 0.3275911
        %v2180 = vadd.f32 %v2172, 1.0
        %v2181 = vadd.f32 %v2173, 1.0
        %v2182 = vadd.f32 %v2174, 1.0
        %v2183 = vadd.f32 %v2175, 1.0
        %v2184 = vadd.f32 %v2176, 1.0
        %v2185 = vadd.f32 %v2177, 1.0
        %v2186 = vadd.f32 %v2178, 1.0
        %v2187 = vadd.f32 %v2179, 1.0
        %v2188 = vrcp.pop %v2180
        %v2189 = vrcp.pop %v2181
        %v2190 = vrcp.pop %v2182
        %v2191 = vrcp.pop %v2183
        %v2192 = vrcp.pop %v2184
        %v2193 = vrcp.pop %v2185
        %v2194 = vrcp.pop %v2186
        %v2195 = vrcp.pop %v2187
        %v2196 = vmul.f32 %v2188, 1.0614054
        %v2197 = vmul.f32 %v2189, 1.0614054
        %v2198 = vmul.f32 %v2190, 1.0614054
        %v2199 = vmul.f32 %v2191, 1.0614054
        %v2200 = vmul.f32 %v2192, 1.0614054
        %v2201 = vmul.f32 %v2193, 1.0614054
        %v2202 = vmul.f32 %v2194, 1.0614054
        %v2203 = vmul.f32 %v2195, 1.0614054
        %v2204 = vadd.f32 %v2196, -1.4531521
        %v2205 = vadd.f32 %v2197, -1.4531521
        %v2206 = vadd.f32 %v2198, -1.4531521
        %v2207 = vadd.f32 %v2199, -1.4531521
        %v2208 = vadd.f32 %v2200, -1.4531521
        %v2209 = vadd.f32 %v2201, -1.4531521
        %v2210 = vadd.f32 %v2202, -1.4531521
        %v2211 = vadd.f32 %v2203, -1.4531521
        %v2212 = vmul.f32 %v2204, %v2188
        %v2213 = vmul.f32 %v2205, %v2189
        %v2214 = vmul.f32 %v2206, %v2190
        %v2215 = vmul.f32 %v2207, %v2191
        %v2216 = vmul.f32 %v2208, %v2192
        %v2217 = vmul.f32 %v2209, %v2193
        %v2218 = vmul.f32 %v2210, %v2194
        %v2219 = vmul.f32 %v2211, %v2195
        %v2220 = vadd.f32 %v2212, 1.4214138
        %v2221 = vadd.f32 %v2213, 1.4214138
        %v2222 = vadd.f32 %v2214, 1.4214138
        %v2223 = vadd.f32 %v2215, 1.4214138
        %v2224 = vadd.f32 %v2216, 1.4214138
        %v2225 = vadd.f32 %v2217, 1.4214138
        %v2226 = vadd.f32 %v2218, 1.4214138
        %v2227 = vadd.f32 %v2219, 1.4214138
        %v2228 = vmul.f32 %v2220, %v2188
        %v2229 = vmul.f32 %v2221, %v2189
        %v2230 = vmul.f32 %v2222, %v2190
        %v2231 = vmul.f32 %v2223, %v2191
        %v2232 = vmul.f32 %v2224, %v2192
        %v2233 = vmul.f32 %v2225, %v2193
        %v2234 = vmul.f32 %v2226, %v2194
        %v2235 = vmul.f32 %v2227, %v2195
        %v2236 = vadd.f32 %v2228, -0.28449672
        %v2237 = vadd.f32 %v2229, -0.28449672
        %v2238 = vadd.f32 %v2230, -0.28449672
        %v2239 = vadd.f32 %v2231, -0.28449672
        %v2240 = vadd.f32 %v2232, -0.28449672
        %v2241 = vadd.f32 %v2233, -0.28449672
        %v2242 = vadd.f32 %v2234, -0.28449672
        %v2243 = vadd.f32 %v2235, -0.28449672
        %v2244 = vmul.f32 %v2236, %v2188
        %v2245 = vmul.f32 %v2237, %v2189
        %v2246 = vmul.f32 %v2238, %v2190
        %v2247 = vmul.f32 %v2239, %v2191
        %v2248 = vmul.f32 %v2240, %v2192
        %v2249 = vmul.f32 %v2241, %v2193
        %v2250 = vmul.f32 %v2242, %v2194
        %v2251 = vmul.f32 %v2243, %v2195
        %v2252 = vadd.f32 %v2244, 0.2548296
        %v2253 = vadd.f32 %v2245, 0.2548296
        %v2254 = vadd.f32 %v2246, 0.2548296
        %v2255 = vadd.f32 %v2247, 0.2548296
        %v2256 = vadd.f32 %v2248, 0.2548296
        %v2257 = vadd.f32 %v2249, 0.2548296
        %v2258 = vadd.f32 %v2250, 0.2548296
        %v2259 = vadd.f32 %v2251, 0.2548296
        %v2260 = vmul.f32 %v2252, %v2188
        %v2261 = vmul.f32 %v2253, %v2189
        %v2262 = vmul.f32 %v2254, %v2190
        %v2263 = vmul.f32 %v2255, %v2191
        %v2264 = vmul.f32 %v2256, %v2192
        %v2265 = vmul.f32 %v2257, %v2193
        %v2266 = vmul.f32 %v2258, %v2194
        %v2267 = vmul.f32 %v2259, %v2195
        %v2268 = vsub.f32 0.0, %v2164
        %v2269 = vsub.f32 0.0, %v2165
        %v2270 = vsub.f32 0.0, %v2166
        %v2271 = vsub.f32 0.0, %v2167
        %v2272 = vsub.f32 0.0, %v2168
        %v2273 = vsub.f32 0.0, %v2169
        %v2274 = vsub.f32 0.0, %v2170
        %v2275 = vsub.f32 0.0, %v2171
        %v2276 = vmul.f32 %v2268, %v2164
        %v2277 = vmul.f32 %v2269, %v2165
        %v2278 = vmul.f32 %v2270, %v2166
        %v2279 = vmul.f32 %v2271, %v2167
        %v2280 = vmul.f32 %v2272, %v2168
        %v2281 = vmul.f32 %v2273, %v2169
        %v2282 = vmul.f32 %v2274, %v2170
        %v2283 = vmul.f32 %v2275, %v2171
        %v2284 = vmul.f32 %v2276, 1.442695
        %v2285 = vpow.pop %v2284
        %v2286 = vmul.f32 %v2277, 1.442695
        %v2287 = vpow.pop %v2286
        %v2288 = vmul.f32 %v2278, 1.442695
        %v2289 = vpow.pop %v2288
        %v2290 = vmul.f32 %v2279, 1.442695
        %v2291 = vpow.pop %v2290
        %v2292 = vmul.f32 %v2280, 1.442695
        %v2293 = vpow.pop %v2292
        %v2294 = vmul.f32 %v2281, 1.442695
        %v2295 = vpow.pop %v2294
        %v2296 = vmul.f32 %v2282, 1.442695
        %v2297 = vpow.pop %v2296
        %v2298 = vmul.f32 %v2283, 1.442695
        %v2299 = vpow.pop %v2298
        %v2300 = vmul.f32 %v2260, %v2285
        %v2301 = vmul.f32 %v2261, %v2287
        %v2302 = vmul.f32 %v2262, %v2289
        %v2303 = vmul.f32 %v2263, %v2291
        %v2304 = vmul.f32 %v2264, %v2293
        %v2305 = vmul.f32 %v2265, %v2295
        %v2306 = vmul.f32 %v2266, %v2297
        %v2307 = vmul.f32 %v2267, %v2299
        %v2308 = vsub.f32 1.0, %v2300
        %v2309 = vsub.f32 1.0, %v2301
        %v2310 = vsub.f32 1.0, %v2302
        %v2311 = vsub.f32 1.0, %v2303
        %v2312 = vsub.f32 1.0, %v2304
        %v2313 = vsub.f32 1.0, %v2305
        %v2314 = vsub.f32 1.0, %v2306
        %v2315 = vsub.f32 1.0, %v2307
        %vm2316 = vcmp.lt.f32.partialorder %v2138, 0.0
        %vm2317 = vcmp.lt.f32.partialorder %v2140, 0.0
        %vm2318 = vcmp.lt.f32.partialorder %v2142, 0.0
        %vm2319 = vcmp.lt.f32.partialorder %v2144, 0.0
        %vm2320 = vcmp.lt.f32.partialorder %v2148, 0.0
        %vm2321 = vcmp.lt.f32.partialorder %v2150, 0.0
        %vm2322 = vcmp.lt.f32.partialorder %v2152, 0.0
        %vm2323 = vcmp.lt.f32.partialorder %v2154, 0.0
        %v2324 = vsub.f32 0.0, %v2308
        %v2325 = vsub.f32 0.0, %v2309
        %v2326 = vsub.f32 0.0, %v2310
        %v2327 = vsub.f32 0.0, %v2311
        %v2328 = vsub.f32 0.0, %v2312
        %v2329 = vsub.f32 0.0, %v2313
        %v2330 = vsub.f32 0.0, %v2314
        %v2331 = vsub.f32 0.0, %v2315
        %v2332 = vsel %vm2316, %v2324, %v2308
        %v2333 = vsel %vm2317, %v2325, %v2309
        %v2334 = vsel %vm2318, %v2326, %v2310
        %v2335 = vsel %vm2319, %v2327, %v2311
        %v2336 = vsel %vm2320, %v2328, %v2312
        %v2337 = vsel %vm2321, %v2329, %v2313
        %v2338 = vsel %vm2322, %v2330, %v2314
        %v2339 = vsel %vm2323, %v2331, %v2315
        %v2340 = vmul.f32 %v2138, 0.5
        %v2341 = vmul.f32 %v2140, 0.5
        %v2342 = vmul.f32 %v2142, 0.5
        %v2343 = vmul.f32 %v2144, 0.5
        %v2344 = vmul.f32 %v2148, 0.5
        %v2345 = vmul.f32 %v2150, 0.5
        %v2346 = vmul.f32 %v2152, 0.5
        %v2347 = vmul.f32 %v2154, 0.5
        %v2348 = vadd.f32 %v2332, 1.0
        %v2349 = vadd.f32 %v2333, 1.0
        %v2350 = vadd.f32 %v2334, 1.0
        %v2351 = vadd.f32 %v2335, 1.0
        %v2352 = vadd.f32 %v2336, 1.0
        %v2353 = vadd.f32 %v2337, 1.0
        %v2354 = vadd.f32 %v2338, 1.0
        %v2355 = vadd.f32 %v2339, 1.0
        %v2356 = vmul.f32 %v2340, %v2348
        %v2357 = vmul.f32 %v2341, %v2349
        %v2358 = vmul.f32 %v2342, %v2350
        %v2359 = vmul.f32 %v2343, %v2351
        %v2360 = vmul.f32 %v2344, %v2352
        %v2361 = vmul.f32 %v2345, %v2353
        %v2362 = vmul.f32 %v2346, %v2354
        %v2363 = vmul.f32 %v2347, %v2355
        %v2364 = vmul.f32 %v2356, %v1405
        %v2365 = vmul.f32 %v2357, %v1406
        %v2366 = vmul.f32 %v2358, %v1407
        %v2367 = vmul.f32 %v2359, %v1408
        %v2368 = vmul.f32 %v2360, %v1409
        %v2369 = vmul.f32 %v2361, %v1410
        %v2370 = vmul.f32 %v2362, %v1411
        %v2371 = vmul.f32 %v2363, %v1412
        %v2372 = vld [vmem:[%s8] sm:$0xf]
        %v2373 = vld [vmem:[%s8 + $0x4] sm:$0xf]
        %v2374 = vld [vmem:[%s8 + $0x8] sm:$0xf]
        %v2375 = vld [vmem:[%s8 + $0xc] sm:$0xf]
        %v2376 = vpack.c.bf16 %v2366, %v2364
        %v2377 = vpack.c.bf16 %v2367, %v2365
        %v2378 = vpack.c.bf16 %v2370, %v2368
        %v2379 = vpack.c.bf16 %v2371, %v2369
        %v2380 = vld [vmem:[%s9] sm:$0xff]
        %v2381 = vld [vmem:[%s9 + $0x8] sm:$0xff]
        %v2382 = vld [vmem:[%s9 + $0x10] sm:$0xff]
        %v2383 = vld [vmem:[%s9 + $0x18] sm:$0xff]
        %v2384 = vld [vmem:[%s9 + $0x20] sm:$0xff]
        %v2385 = vld [vmem:[%s9 + $0x28] sm:$0xff]
        %v2386 = vld [vmem:[%s9 + $0x30] sm:$0xff]
        %v2387 = vld [vmem:[%s9 + $0x38] sm:$0xff]
        %v2392 = vunpack.c.l.b16 %v2372
        %v2393 = vunpack.c.l.b16 %v2373
        %v2394 = vunpack.c.l.b16 %v2374
        %v2395 = vunpack.c.l.b16 %v2375
        %v2396 = vpack.c.b16 %v2393, %v2392
        %v2397 = vpack.c.b16 %v2395, %v2394
        %v2399 = vsel %vm477, %v2396, 0
        %v2402 = vsel %vm477, %v2397, 0
        %2404 = vmatprep.subr.bf16.mxu0 %v2377
        %2405 = vmatpush1.bf16.msra.mxu0 %v2376
        %2406 = vmatprep.subr.bf16.mxu0 %v2379
        %2407 = vmatpush1.bf16.msra.mxu0 %v2378
        %2408 = vmatprep.subr.bf16.mxu0 0
        %2409 = vmatpush1.bf16.msra.mxu0 0
        %2410 = vmatprep.subr.bf16.mxu0 0
        %2411 = vmatpush1.bf16.msra.mxu0 0
        %2412 = vmatprep.subr.bf16.mxu0 0
        %2413 = vmatpush1.bf16.msra.mxu0 0
        %2414 = vmatprep.subr.bf16.mxu0 0
        %2415 = vmatpush1.bf16.msra.mxu0 0
        %2416 = vmatprep.subr.bf16.mxu0 0
        %2417 = vmatpush1.bf16.msra.mxu0 0
        %2418 = vmatprep.subr.bf16.mxu0 0
        %2419 = vmatpush1.bf16.msra.mxu0 0
        %2420 = vmatprep.subr.bf16.mxu0 0
        %2421 = vmatpush1.bf16.msra.mxu0 0
        %2422 = vmatprep.subr.bf16.mxu0 0
        %2423 = vmatpush1.bf16.msra.mxu0 0
        %2424 = vmatprep.subr.bf16.mxu0 0
        %2425 = vmatpush1.bf16.msra.mxu0 0
        %2426 = vmatprep.subr.bf16.mxu0 0
        %2427 = vmatpush1.bf16.msra.mxu0 0
        %2428 = vmatprep.subr.bf16.mxu0 0
        %2429 = vmatpush1.bf16.msra.mxu0 0
        %2430 = vmatprep.subr.bf16.mxu0 0
        %2431 = vmatpush1.bf16.msra.mxu0 0
        %2432 = vmatprep.subr.bf16.mxu0 0
        %2433 = vmatpush1.bf16.msra.mxu0 0
        %2434 = vmatprep.subr.bf16.mxu0 0
        %2435 = vmatpush1.bf16.msra.mxu0 0
        %2436 = vmatprep.mubr.bf16.mxu0 0
        %2437 = vmatmul.mubr.bf16.gmra.mrb[0].mxu0 %v2399
        %v2438 = vpop.f32.mrb[0].mxu0
        %v2439 = vadd.f32 %v2380, %v2438
        %v2440 = vpop.f32.mrb[0].mxu0
        %v2441 = vadd.f32 %v2381, %v2440
        %v2442 = vpop.f32.mrb[0].mxu0
        %v2443 = vadd.f32 %v2382, %v2442
        %v2444 = vpop.f32.mrb[0].mxu0
        %v2445 = vadd.f32 %v2383, %v2444
        %2446 = vmatprep.mubr.bf16.mxu0 0
        %2447 = vmatmul.mubr.bf16.gmra.mrb[0].mxu0 %v2402
        %v2448 = vpop.f32.mrb[0].mxu0
        %v2449 = vadd.f32 %v2384, %v2448
        %v2450 = vpop.f32.mrb[0].mxu0
        %v2451 = vadd.f32 %v2385, %v2450
        %v2452 = vpop.f32.mrb[0].mxu0
        %v2453 = vadd.f32 %v2386, %v2452
        %v2454 = vpop.f32.mrb[0].mxu0
        %v2455 = vadd.f32 %v2387, %v2454
        %2456 = vdwg.mxu0
        %2457 = vst [vmem:[%s435] sm:$0xff] %v2439
        %2458 = vst [vmem:[%s435 + $0x8] sm:$0xff] %v2441
        %2459 = vst [vmem:[%s435 + $0x10] sm:$0xff] %v2443
        %2460 = vst [vmem:[%s435 + $0x18] sm:$0xff] %v2445
        %2461 = vst [vmem:[%s435 + $0x20] sm:$0xff] %v2449
        %2462 = vst [vmem:[%s435 + $0x28] sm:$0xff] %v2451
        %2463 = vst [vmem:[%s435 + $0x30] sm:$0xff] %v2453
        %2464 = vst [vmem:[%s435 + $0x38] sm:$0xff] %v2455
        %s2465 = sand.u32 %s252, 1
        %s2466 = scalar_lea.sflag [#allocation4], %s2465
        %s2467 = sand.u32 %s252, 1
        %s2468 = smul.addr %s2467, 64
        %s2469 = scalar_lea.vmem [#allocation11], %s2468
        // Predicated region
        $region81: #{tpu_custom_call.1} parent=59 // pred_check
          %p2470 = pneg %p262
        $region82: #{tpu_custom_call.1} parent=59 // pred_check_branch
          %2472 = sbr.rel (%p2470) target = $region84
        $region83: #{tpu_custom_call.1} parent=59 // pred_region
          %s2474 = ssub.s32 1024, 1024
          %2475 = vsyncadd %s2466, %s2474
          %s2476 = smul.addr %s29, 8
          %s2477 = smul.addr %s2476, 128
          %s2478 = scalar_lea.hbm %s10, %s2477
          %s2479 = sshll.u32 %s2469, 4
          %s2480 = int_to_ptr.vmem [resolvable:$true] %s2479
          %2485 = dma.vmem_to_hbm [thread:$0]  %s2480, 1024, %s2478, %s2466, 256, 256, 16
        $region84: #{tpu_custom_call.1} parent=59 // pred_fallthru
          _
      $region60: #{tpu_custom_call.1} parent=5 // pred_fallthru
        _
      %p2486 = scmp.le.s32.totalorder 2, %s24
      // Predicated region
      $region85: #{tpu_custom_call.1} parent=5 // pred_check
        %p2487 = pneg %p2486
      $region86: #{tpu_custom_call.1} parent=5 // pred_check_branch
        %2489 = sbr.rel (%p2487) target = $region88
      $region87: #{tpu_custom_call.1} parent=5 // pred_region
        %s2490 = ssub.s32 %s24, 2
        // Predicated region
        $region89: #{tpu_custom_call.1} parent=87 // pred_check
          %p2491 = pneg %p268
        $region90: #{tpu_custom_call.1} parent=87 // pred_check_branch
          %2493 = sbr.rel (%p2491) target = $region92
        $region91: #{tpu_custom_call.1} parent=87 // pred_region
          %s2494 = sand.u32 %s253, 1
          %s2495 = scalar_lea.sflag [#allocation4], %s2494
          %s2496 = sand.u32 %s253, 1
          %s2497 = smul.addr %s2496, 64
          %s2498 = scalar_lea.vmem [#allocation11], %s2497
          %2499 = dma.done %s2495, 1024
        $region92: #{tpu_custom_call.1} parent=87 // pred_fallthru
          _
      $region88: #{tpu_custom_call.1} parent=5 // pred_fallthru
        _
    $region6: #{tpu_custom_call.1} parent=1 // loop_footer
      %s28 = sadd.s32 1, %s24
    $region7: #{tpu_custom_call.1} parent=1 // loop_footer_branch
      %23 = sbr.rel target = $region3
    $region8: #{tpu_custom_call.1} parent=1 // loop_exit
      _
    %2500 = vsyncpa [#allocation3], 1
    %s2501 = scalar_lea.sflag [#allocation3], 1
    %2502 = vsyncpa %s2501, 1
    %2503 = vsyncpa [#allocation6], 1
    %2504 = vsyncpa [#allocation9], 1
    %2505 = vsyncpa [#allocation4], 1
    %s2506 = scalar_lea.sflag [#allocation4], 1
    %2507 = vsyncpa %s2506, 1

</llo_original>
